<compile_context>
chip_gen: v7x
topology: tpu7x:2x2x1
jax: 0.10.0
libtpu: 0.0.40
codegen_flags: <defaults>
</compile_context>

<pallas_src>
import functools

import jax
import jax.numpy as jnp
import numpy as np
from jax import lax
from jax.experimental import pallas as pl
from jax.experimental.pallas import tpu as pltpu

INPUT_DIM = 512
HIDDEN_DIM = 256
FC_OUT = 768

_VMEM_LIMIT = 48 * 1024 * 1024  # generous for every pass, < v7x 64 MiB physical


def _round_up(x, m):
    return ((x + m - 1) // m) * m


def _sigmoid(x):
    # One EUP op (tanh) instead of exp + divide on the serial chain.
    return 0.5 * jnp.tanh(0.5 * x) + 0.5


# ----------------------------------------------------------------------------
# Pass 1: hoisted input projection (parallel, bandwidth-bound).
#   gates_x[t, b] = x[b, t] @ W_ih^T + (b_ih + b_hh), stored bf16 in (T,B,4H).
# ----------------------------------------------------------------------------
def input_proj_kernel(x_ref, w_ih_ref, b_ref, gx_ref):
    tc1, bt, _ = x_ref.shape
    x2 = x_ref[...].reshape(tc1 * bt, INPUT_DIM)          # bf16, rows = (t, b)
    g = (jnp.dot(x2, w_ih_ref[...], preferred_element_type=jnp.float32)
         + b_ref[...])                                    # f32 (rows, 4H)
    gx_ref[...] = g.reshape(tc1, bt, 4 * HIDDEN_DIM).astype(gx_ref.dtype)


# ----------------------------------------------------------------------------
# Pass 2: serial LSTM recurrence, time-chunked; h/c carried in VMEM scratch.
#   Per step:  gates = gx[t] + h @ W_hh^T  ->  i,f,g,o  ->  c,h  (f32 math).
# ----------------------------------------------------------------------------
def lstm_recurrence_kernel(gx_ref, w_hh_ref, h_out_ref, h_scr, c_scr, *,
                           tc, unroll):
    H = HIDDEN_DIM

    @pl.when(pl.program_id(1) == 0)
    def _():
        h_scr[...] = jnp.zeros_like(h_scr)
        c_scr[...] = jnp.zeros_like(c_scr)

    w_hh = w_hh_ref[...]                                  # (H, 4H) bf16

    def step(s, carry):
        h, c = carry                                      # bf16 (bt,H), f32 (bt,H)
        gates = gx_ref[s].astype(jnp.float32) + jnp.dot(
            h, w_hh, preferred_element_type=jnp.float32)  # f32 (bt, 4H)
        i_g = _sigmoid(gates[:, 0:H])
        f_g = _sigmoid(gates[:, H:2 * H])
        g_g = jnp.tanh(gates[:, 2 * H:3 * H])
        o_g = _sigmoid(gates[:, 3 * H:4 * H])
        c_new = f_g * c + i_g * g_g
        h_new = (o_g * jnp.tanh(c_new)).astype(jnp.bfloat16)
        h_out_ref[s] = h_new
        return h_new, c_new

    h_fin, c_fin = lax.fori_loop(0, tc, step, (h_scr[...], c_scr[...]),
                                 unroll=unroll)
    h_scr[...] = h_fin
    c_scr[...] = c_fin


# ----------------------------------------------------------------------------
# Pass 3: fused FC + AdaptiveMaxPool1d over bt3 batch rows per grid step.
#   h block is read directly in (T_pad, bt3, H) layout; rows are reshaped to
#   (T_pad*bt3, H) for one MXU-friendly matmul, pooled per PyTorch window
#   semantics (start = floor(j*T/L), end = ceil((j+1)*T/L)), only real T used.
# ----------------------------------------------------------------------------
def fc_pool_kernel(h_ref, w_fc_ref, b_fc_ref, out_ref, *, seq_len,
                   target_length):
    t_pad, bt3, _ = h_ref.shape
    h2 = h_ref[...].reshape(t_pad * bt3, HIDDEN_DIM)      # bf16, rows = (t, b)
    y = (jnp.dot(h2, w_fc_ref[...], preferred_element_type=jnp.float32)
         + b_fc_ref[...])                                 # f32 (t_pad*bt3, 768)
    y3 = y.reshape(t_pad, bt3, FC_OUT)
    for j in range(target_length):
        start = (j * seq_len) // target_length
        end = -(-((j + 1) * seq_len) // target_length)    # ceil-div, <= seq_len
        out_ref[j] = jnp.max(y3[start:end], axis=0)       # dense (bt3,768) store


def lstm_model_forward(x_btd, params, target_length):
    """x_btd: (B, T, INPUT_DIM) float32 -> (B, target_length, 768) float32."""
    w_ih_T, w_hh_T, b, w_fc_T, b_fc = params
    B, T, D = x_btd.shape
    assert D == INPUT_DIM
    H = HIDDEN_DIM
    L = target_length

    # ---- tile-size / padding policy (friendly multiples, no divisor search)
    tc = 16 if T >= 16 else 8                  # recurrence time chunk
    T_pad = _round_up(T, tc)
    if B >= 128:
        bt = 128                               # MXU-row fill on the serial matmul
        B_pad = _round_up(B, bt)
    else:
        B_pad = _round_up(B, 16)               # 16: bf16 sublane packing
        bt = B_pad
    tc1 = tc if bt * tc <= 1024 else 8         # pass-1 rows per step <= ~1024

    # pass-3 batch rows per step: keep the f32 FC intermediate <= ~6 MiB
    bt3 = 16
    cand = 16
    while cand <= min(B_pad, 128):
        if B_pad % cand == 0 and T_pad * cand * FC_OUT * 4 <= 6 * 1024 * 1024:
            bt3 = cand
        cand += 16
    # TODO(synk): very long sequences (T_pad > ~500) would want a time-tiled
    # pass 3 (running window max) instead of one (T_pad*bt3, 768) FC result.

    # bf16 cast + (B,T,D)->(T,B,D) + pad; XLA fuses this into one bf16 relayout.
    x_tb = jnp.transpose(x_btd.astype(jnp.bfloat16), (1, 0, 2))
    x_tb = jnp.pad(x_tb, ((0, T_pad - T), (0, B_pad - B), (0, 0)))

    # ---- Pass 1: input projection (parallel) -> bf16 gates in (T,B,4H) ----
    gates = pl.pallas_call(
        input_proj_kernel,
        out_shape=jax.ShapeDtypeStruct((T_pad, B_pad, 4 * H), jnp.bfloat16),
        grid_spec=pltpu.PrefetchScalarGridSpec(
            num_scalar_prefetch=0,
            grid=(B_pad // bt, T_pad // tc1),
            in_specs=[
                pl.BlockSpec((tc1, bt, INPUT_DIM), lambda bb, tt: (tt, bb, 0)),
                pl.BlockSpec((INPUT_DIM, 4 * H), lambda bb, tt: (0, 0)),
                pl.BlockSpec((1, 4 * H), lambda bb, tt: (0, 0)),
            ],
            out_specs=pl.BlockSpec((tc1, bt, 4 * H),
                                   lambda bb, tt: (tt, bb, 0)),
        ),
        compiler_params=pltpu.CompilerParams(
            dimension_semantics=("parallel", "parallel"),
            vmem_limit_bytes=_VMEM_LIMIT),
    )(x_tb, w_ih_T, b)

    # ---- Pass 2: serial recurrence (time-chunked, batch-tiled) ------------
    h_all = pl.pallas_call(
        functools.partial(lstm_recurrence_kernel, tc=tc, unroll=4),
        out_shape=jax.ShapeDtypeStruct((T_pad, B_pad, H), jnp.bfloat16),
        grid_spec=pltpu.PrefetchScalarGridSpec(
            num_scalar_prefetch=0,
            grid=(B_pad // bt, T_pad // tc),
            in_specs=[
                pl.BlockSpec((tc, bt, 4 * H), lambda bb, tt: (tt, bb, 0)),
                pl.BlockSpec((H, 4 * H), lambda bb, tt: (0, 0)),
            ],
            out_specs=pl.BlockSpec((tc, bt, H), lambda bb, tt: (tt, bb, 0)),
            scratch_shapes=[
                pltpu.VMEM((bt, H), jnp.bfloat16),   # h carry
                pltpu.VMEM((bt, H), jnp.float32),    # c carry
            ],
        ),
        compiler_params=pltpu.CompilerParams(
            dimension_semantics=("parallel", "arbitrary"),
            vmem_limit_bytes=_VMEM_LIMIT),
    )(gates, w_hh_T)

    # ---- Pass 3: fused FC + adaptive max-pool (parallel over batch tiles) -
    pooled_lb = pl.pallas_call(
        functools.partial(fc_pool_kernel, seq_len=T, target_length=L),
        out_shape=jax.ShapeDtypeStruct((L, B_pad, FC_OUT), jnp.float32),
        grid_spec=pltpu.PrefetchScalarGridSpec(
            num_scalar_prefetch=0,
            grid=(B_pad // bt3,),
            in_specs=[
                pl.BlockSpec((T_pad, bt3, H), lambda bb: (0, bb, 0)),
                pl.BlockSpec((H, FC_OUT), lambda bb: (0, 0)),
                pl.BlockSpec((1, FC_OUT), lambda bb: (0, 0)),
            ],
            out_specs=pl.BlockSpec((L, bt3, FC_OUT), lambda bb: (0, bb, 0)),
        ),
        compiler_params=pltpu.CompilerParams(
            dimension_semantics=("parallel",),
            vmem_limit_bytes=_VMEM_LIMIT),
    )(h_all, w_fc_T, b_fc)

    # Final tiny permute (L, B, 768) -> (B, L, 768); L << T so this is cheap.
    return jnp.transpose(pooled_lb, (1, 0, 2))[:B]


# ----------------------------------------------------------------------------
# Pure-JAX reference (mirrors PyTorch semantics) for a correctness check.
# ----------------------------------------------------------------------------
def lstm_model_ref(x_btd, params, target_length):
    w_ih_T, w_hh_T, b, w_fc_T, b_fc = params
    w_ih_T = w_ih_T.astype(jnp.float32)
    w_hh_T = w_hh_T.astype(jnp.float32)
    w_fc_T = w_fc_T.astype(jnp.float32)
    B, T, _ = x_btd.shape
    H = HIDDEN_DIM
    h = jnp.zeros((B, H), jnp.float32)
    c = jnp.zeros((B, H), jnp.float32)
    outs = []
    for t in range(T):
        gates = x_btd[:, t] @ w_ih_T + h @ w_hh_T + b
        i_g = jax.nn.sigmoid(gates[:, :H])
        f_g = jax.nn.sigmoid(gates[:, H:2 * H])
        g_g = jnp.tanh(gates[:, 2 * H:3 * H])
        o_g = jax.nn.sigmoid(gates[:, 3 * H:])
        c = f_g * c + i_g * g_g
        h = o_g * jnp.tanh(c)
        outs.append(h @ w_fc_T + b_fc)
    y = jnp.stack(outs, axis=1)                      # (B, T, 768)
    pooled = []
    for j in range(target_length):
        s = (j * T) // target_length
        e = -(-((j + 1) * T) // target_length)
        pooled.append(jnp.max(y[:, s:e, :], axis=1))
    return jnp.stack(pooled, axis=1)                 # (B, L, 768)


def make_params(key):
    k = 1.0 / jnp.sqrt(jnp.float32(HIDDEN_DIM))
    ks = jax.random.split(key, 6)
    w_ih = jax.random.uniform(ks[0], (4 * HIDDEN_DIM, INPUT_DIM),
                              jnp.float32, -k, k)
    w_hh = jax.random.uniform(ks[1], (4 * HIDDEN_DIM, HIDDEN_DIM),
                              jnp.float32, -k, k)
    b_ih = jax.random.uniform(ks[2], (4 * HIDDEN_DIM,), jnp.float32, -k, k)
    b_hh = jax.random.uniform(ks[3], (4 * HIDDEN_DIM,), jnp.float32, -k, k)
    w_fc = jax.random.uniform(ks[4], (FC_OUT, HIDDEN_DIM),
                              jnp.float32, -k, k)
    b_fc = jax.random.uniform(ks[5], (FC_OUT,), jnp.float32, -k, k)
    # Pre-transpose weights (row-major matmuls); matmul operands are bf16,
    # biases and all elementwise math stay f32.
    return (w_ih.T.astype(jnp.bfloat16),                    # (512, 1024)
            w_hh.T.astype(jnp.bfloat16),                    # (256, 1024)
            (b_ih + b_hh).reshape(1, 4 * HIDDEN_DIM),       # (1, 1024) f32
            w_fc.T.astype(jnp.bfloat16),                    # (256, 768)
            b_fc.reshape(1, FC_OUT))                        # (1, 768) f32


if __name__ == "__main__":
    key = jax.random.PRNGKey(0)
    kx, kp = jax.random.split(key)

    B, T = 2, 8
    target_length = 4
    x = jax.random.normal(kx, (B, T, INPUT_DIM), jnp.float32)
    params = make_params(kp)

    out = jax.block_until_ready(lstm_model_forward(x, params, target_length))
    ref = jax.block_until_ready(lstm_model_ref(x, params, target_length))

    assert out.shape == (B, target_length, FC_OUT), out.shape
    np.testing.assert_allclose(np.asarray(out), np.asarray(ref),
                               rtol=3e-2, atol=3e-2)

    print("KERNEL_OK")
</pallas_src>

<mosaic_0001>
module attributes {stable_mosaic.version = 11 : i64} {
  func.func @input_proj_kernel(%arg0: i32, %arg1: i32, %arg2: memref<8x16x512xbf16, #tpu.memory_space<vmem>>, %arg3: memref<512x1024xbf16, #tpu.memory_space<vmem>>, %arg4: memref<1x1024xf32, #tpu.memory_space<vmem>>, %arg5: memref<8x16x1024xbf16, #tpu.memory_space<vmem>>) attributes {dimension_semantics = [#tpu.dimension_semantics<parallel>, #tpu.dimension_semantics<parallel>], iteration_bounds = array<i64: 1, 1>, scalar_prefetch = 0 : i64, scratch_operands = 0 : i64, tpu.core_type = #tpu.core_type<tc>, window_params = [{transform_indices = @transform_0, window_bounds = array<i64: 8, 16, 512>}, {pipeline_mode = #tpu.pipeline_mode<synchronous>, transform_indices = @transform_1, window_bounds = array<i64: 512, 1024>}, {pipeline_mode = #tpu.pipeline_mode<synchronous>, transform_indices = @transform_2, window_bounds = array<i64: 1, 1024>}, {transform_indices = @transform_3, window_bounds = array<i64: 8, 16, 1024>}]} {
    %c0 = arith.constant 0 : index
    %c0_0 = arith.constant 0 : index
    %c0_1 = arith.constant 0 : index
    %0 = vector.load %arg2[%c0, %c0_0, %c0_1] : memref<8x16x512xbf16, #tpu.memory_space<vmem>>, vector<8x16x512xbf16>
    %1 = vector.shape_cast %0 : vector<8x16x512xbf16> to vector<128x512xbf16>
    %c0_2 = arith.constant 0 : index
    %c0_3 = arith.constant 0 : index
    %2 = vector.load %arg3[%c0_2, %c0_3] : memref<512x1024xbf16, #tpu.memory_space<vmem>>, vector<512x1024xbf16>
    %cst = arith.constant dense<0.000000e+00> : vector<128x1024xf32>
    %3 = tpu.matmul %1, %2, %cst {dimension_numbers = #tpu.dot_dimension_numbers<[1], [0], [0], [1], [0, 0, 1, 1], [], []>} : vector<128x512xbf16>, vector<512x1024xbf16>, vector<128x1024xf32> -> vector<128x1024xf32>
    %c0_4 = arith.constant 0 : index
    %c0_5 = arith.constant 0 : index
    %4 = vector.load %arg4[%c0_4, %c0_5] : memref<1x1024xf32, #tpu.memory_space<vmem>>, vector<1x1024xf32>
    %5 = vector.broadcast %4 : vector<1x1024xf32> to vector<128x1024xf32>
    %6 = arith.addf %3, %5 : vector<128x1024xf32>
    %7 = vector.shape_cast %6 : vector<128x1024xf32> to vector<8x16x1024xf32>
    %8 = arith.truncf %7 : vector<8x16x1024xf32> to vector<8x16x1024xbf16>
    %c0_6 = arith.constant 0 : index
    %c0_7 = arith.constant 0 : index
    %c0_8 = arith.constant 0 : index
    %9 = vector.load %arg5[%c0_6, %c0_7, %c0_8] : memref<8x16x1024xbf16, #tpu.memory_space<vmem>>, vector<8x16x1024xbf16>
    tpu.vector_store %arg5[%c0_6, %c0_7, %c0_8], %8 {strides = array<i32>} : memref<8x16x1024xbf16, #tpu.memory_space<vmem>>, vector<8x16x1024xbf16>,
    return
  }
  func.func @transform_0(%arg0: i32, %arg1: i32) -> (i32, i32, i32) {
    %c0_i32 = arith.constant 0 : i32
    %c0_i32_0 = arith.constant 0 : i32
    return %arg1, %arg0, %c0_i32 : i32, i32, i32
  }
  func.func @transform_1(%arg0: i32, %arg1: i32) -> (i32, i32) {
    %c0_i32 = arith.constant 0 : i32
    %c0_i32_0 = arith.constant 0 : i32
    %c0_i32_1 = arith.constant 0 : i32
    return %c0_i32, %c0_i32_0 : i32, i32
  }
  func.func @transform_2(%arg0: i32, %arg1: i32) -> (i32, i32) {
    %c0_i32 = arith.constant 0 : i32
    %c0_i32_0 = arith.constant 0 : i32
    %c0_i32_1 = arith.constant 0 : i32
    return %c0_i32, %c0_i32_0 : i32, i32
  }
  func.func @transform_3(%arg0: i32, %arg1: i32) -> (i32, i32, i32) {
    %c0_i32 = arith.constant 0 : i32
    %c0_i32_0 = arith.constant 0 : i32
    return %arg1, %arg0, %c0_i32 : i32, i32, i32
  }
}

</mosaic_0001>

<llo_original>
// kernel: tpu_custom_call.1
$region0: #{tpu_custom_call.1}
  #allocation0 [shape = 'u32[]', space=smem, size = 0x4, offset = 0x4, fixed_abs, tag = 'smem constant byte address 0x4 - core index']
  #allocation1 [shape = 'u32[144,128]{1,0:T(1,128)}', space=vmem, size = 0x12000, scoped, tag = 'internal scratch']
  %s0 = inlined_call_operand.hbm [shape: bf16[8,16,512], index: 0, kind: input, shape index: {}]
  %s1 = inlined_call_operand.hbm [shape: bf16[512,1024], index: 1, kind: input, shape index: {}]
  %s2 = inlined_call_operand.hbm [shape: f32[1,1024], index: 2, kind: input, shape index: {}]
  %s3 = inlined_call_operand.hbm [shape: bf16[8,16,1024], index: 3, kind: output, shape index: {}]
  %s4 = sld [smem:[#allocation0]]
  $region34: #{tpu_custom_call.1} parent=0
    _
  %s6 = ssub.s32 1, %s4
  %s7 = scalar_select 0, %s6, %s4
  $region1: #{tpu_custom_call.1} parent=0
    #allocation2 [shape = 'u8[131072]{0}', space=vmem, size = 0x20000, scoped, tag = 'input window, operand 0, single buffered']
    #allocation3 [shape = 's32[1]{0}', space=sflag, size = 0x4, scoped, tag = 'scoped memory for tpu_custom_call.1']
    #allocation4 [shape = 's32[1]{0}', space=sflag, size = 0x4, scoped, tag = 'scoped memory for tpu_custom_call.1']
    #allocation5 [shape = 'u8[1048576]{0}', space=vmem, size = 0x100000, scoped, tag = 'input window, operand 1, single buffered']
    #allocation6 [shape = 's32[1]{0}', space=sflag, size = 0x4, scoped, tag = 'scoped memory for tpu_custom_call.1']
    #allocation7 [shape = 'u8[4096]{0}', space=vmem, size = 0x1000, scoped, tag = 'input window, operand 2, single buffered']
    #allocation8 [shape = 'u8[262144]{0}', space=vmem, size = 0x40000, scoped, tag = 'output window, operand 0, single buffered']
    %8 = vsyncpa [#allocation3], 0
    %9 = vsyncpa [#allocation6], 0
    %10 = vsyncpa [#allocation4], 0
    // Predicated region
    $region2: #{tpu_custom_call.1} parent=1 // pred_check
      _
    $region3: #{tpu_custom_call.1} parent=1 // pred_check_branch
      %12 = sbr.rel (0) target = $region5
    $region4: #{tpu_custom_call.1} parent=1 // pred_region
      %s14 = ssub.s32 4096, 4096
      %15 = vsyncadd [#allocation3], %s14
      %s16 = sshll.u32 [#allocation2], 4
      %s17 = int_to_ptr.vmem [resolvable:$true] %s16
      %22 = dma.hbm_to_vmem [thread:$0]  %s0, 4096, %s17, [#allocation3], 256, 256, 16
    $region5: #{tpu_custom_call.1} parent=1 // pred_fallthru
      _
    // Predicated region
    $region6: #{tpu_custom_call.1} parent=1 // pred_check
      _
    $region7: #{tpu_custom_call.1} parent=1 // pred_check_branch
      %24 = sbr.rel (0) target = $region9
    $region8: #{tpu_custom_call.1} parent=1 // pred_region
      %s26 = ssub.s32 32768, 32768
      %27 = vsyncadd [#allocation6], %s26
      %s28 = sshll.u32 [#allocation5], 4
      %s29 = int_to_ptr.vmem [resolvable:$true] %s28
      %34 = dma.hbm_to_vmem [thread:$0]  %s1, 32768, %s29, [#allocation6], 512, 512, 32
    $region9: #{tpu_custom_call.1} parent=1 // pred_fallthru
      _
    // Predicated region
    $region10: #{tpu_custom_call.1} parent=1 // pred_check
      _
    $region11: #{tpu_custom_call.1} parent=1 // pred_check_branch
      %36 = sbr.rel (0) target = $region13
    $region12: #{tpu_custom_call.1} parent=1 // pred_region
      %s38 = ssub.s32 128, 128
      %39 = vsyncadd [#allocation6], %s38
      %s41 = sshll.u32 [#allocation7], 4
      %s42 = int_to_ptr.vmem [resolvable:$true] %s41
      %44 = dma.hbm_to_vmem [thread:$0]  %s2, 128, %s42, [#allocation6]
    $region13: #{tpu_custom_call.1} parent=1 // pred_fallthru
      _
    // Predicated region
    $region14: #{tpu_custom_call.1} parent=1 // pred_check
      _
    $region15: #{tpu_custom_call.1} parent=1 // pred_check_branch
      %46 = sbr.rel (0) target = $region17
    $region16: #{tpu_custom_call.1} parent=1 // pred_region
      %47 = dma.done [#allocation3], 4096
    $region17: #{tpu_custom_call.1} parent=1 // pred_fallthru
      _
    // Predicated region
    $region18: #{tpu_custom_call.1} parent=1 // pred_check
      _
    $region19: #{tpu_custom_call.1} parent=1 // pred_check_branch
      %49 = sbr.rel (0) target = $region21
    $region20: #{tpu_custom_call.1} parent=1 // pred_region
      %50 = dma.done [#allocation6], 32768
    $region21: #{tpu_custom_call.1} parent=1 // pred_fallthru
      _
    // Predicated region
    $region22: #{tpu_custom_call.1} parent=1 // pred_check
      _
    $region23: #{tpu_custom_call.1} parent=1 // pred_check_branch
      %52 = sbr.rel (0) target = $region25
    $region24: #{tpu_custom_call.1} parent=1 // pred_region
      %53 = dma.done [#allocation6], 128
    $region25: #{tpu_custom_call.1} parent=1 // pred_fallthru
      _
    %v54 = vld [vmem:[#allocation2] sm:$0xff]
    %v55 = vld [vmem:[#allocation2 + $0x8] sm:$0xff]
    %v56 = vld [vmem:[#allocation2 + $0x10] sm:$0xff]
    %v57 = vld [vmem:[#allocation2 + $0x18] sm:$0xff]
    %v58 = vld [vmem:[#allocation2 + $0x20] sm:$0xff]
    %v59 = vld [vmem:[#allocation2 + $0x28] sm:$0xff]
    %v60 = vld [vmem:[#allocation2 + $0x30] sm:$0xff]
    %v61 = vld [vmem:[#allocation2 + $0x38] sm:$0xff]
    %v62 = vld [vmem:[#allocation2 + $0x40] sm:$0xff]
    %v63 = vld [vmem:[#allocation2 + $0x48] sm:$0xff]
    %v64 = vld [vmem:[#allocation2 + $0x50] sm:$0xff]
    %v65 = vld [vmem:[#allocation2 + $0x58] sm:$0xff]
    %v66 = vld [vmem:[#allocation2 + $0x60] sm:$0xff]
    %v67 = vld [vmem:[#allocation2 + $0x68] sm:$0xff]
    %v68 = vld [vmem:[#allocation2 + $0x70] sm:$0xff]
    %v69 = vld [vmem:[#allocation2 + $0x78] sm:$0xff]
    %v70 = vld [vmem:[#allocation2 + $0x80] sm:$0xff]
    %v71 = vld [vmem:[#allocation2 + $0x88] sm:$0xff]
    %v72 = vld [vmem:[#allocation2 + $0x90] sm:$0xff]
    %v73 = vld [vmem:[#allocation2 + $0x98] sm:$0xff]
    %v74 = vld [vmem:[#allocation2 + $0xa0] sm:$0xff]
    %v75 = vld [vmem:[#allocation2 + $0xa8] sm:$0xff]
    %v76 = vld [vmem:[#allocation2 + $0xb0] sm:$0xff]
    %v77 = vld [vmem:[#allocation2 + $0xb8] sm:$0xff]
    %v78 = vld [vmem:[#allocation2 + $0xc0] sm:$0xff]
    %v79 = vld [vmem:[#allocation2 + $0xc8] sm:$0xff]
    %v80 = vld [vmem:[#allocation2 + $0xd0] sm:$0xff]
    %v81 = vld [vmem:[#allocation2 + $0xd8] sm:$0xff]
    %v82 = vld [vmem:[#allocation2 + $0xe0] sm:$0xff]
    %v83 = vld [vmem:[#allocation2 + $0xe8] sm:$0xff]
    %v84 = vld [vmem:[#allocation2 + $0xf0] sm:$0xff]
    %v85 = vld [vmem:[#allocation2 + $0xf8] sm:$0xff]
    %v86 = vld [vmem:[#allocation5] sm:$0xff]
    %v87 = vld [vmem:[#allocation5 + $0x8] sm:$0xff]
    %v88 = vld [vmem:[#allocation5 + $0x10] sm:$0xff]
    %v89 = vld [vmem:[#allocation5 + $0x18] sm:$0xff]
    %v90 = vld [vmem:[#allocation5 + $0x20] sm:$0xff]
    %v91 = vld [vmem:[#allocation5 + $0x28] sm:$0xff]
    %v92 = vld [vmem:[#allocation5 + $0x30] sm:$0xff]
    %v93 = vld [vmem:[#allocation5 + $0x38] sm:$0xff]
    %v94 = vld [vmem:[#allocation5 + $0x40] sm:$0xff]
    %v95 = vld [vmem:[#allocation5 + $0x48] sm:$0xff]
    %v96 = vld [vmem:[#allocation5 + $0x50] sm:$0xff]
    %v97 = vld [vmem:[#allocation5 + $0x58] sm:$0xff]
    %v98 = vld [vmem:[#allocation5 + $0x60] sm:$0xff]
    %v99 = vld [vmem:[#allocation5 + $0x68] sm:$0xff]
    %v100 = vld [vmem:[#allocation5 + $0x70] sm:$0xff]
    %v101 = vld [vmem:[#allocation5 + $0x78] sm:$0xff]
    %v102 = vld [vmem:[#allocation5 + $0x80] sm:$0xff]
    %v103 = vld [vmem:[#allocation5 + $0x88] sm:$0xff]
    %v104 = vld [vmem:[#allocation5 + $0x90] sm:$0xff]
    %v105 = vld [vmem:[#allocation5 + $0x98] sm:$0xff]
    %v106 = vld [vmem:[#allocation5 + $0xa0] sm:$0xff]
    %v107 = vld [vmem:[#allocation5 + $0xa8] sm:$0xff]
    %v108 = vld [vmem:[#allocation5 + $0xb0] sm:$0xff]
    %v109 = vld [vmem:[#allocation5 + $0xb8] sm:$0xff]
    %v110 = vld [vmem:[#allocation5 + $0xc0] sm:$0xff]
    %v111 = vld [vmem:[#allocation5 + $0xc8] sm:$0xff]
    %v112 = vld [vmem:[#allocation5 + $0xd0] sm:$0xff]
    %v113 = vld [vmem:[#allocation5 + $0xd8] sm:$0xff]
    %v114 = vld [vmem:[#allocation5 + $0xe0] sm:$0xff]
    %v115 = vld [vmem:[#allocation5 + $0xe8] sm:$0xff]
    %v116 = vld [vmem:[#allocation5 + $0xf0] sm:$0xff]
    %v117 = vld [vmem:[#allocation5 + $0xf8] sm:$0xff]
    %v118 = vld [vmem:[#allocation5 + $0x100] sm:$0xff]
    %v119 = vld [vmem:[#allocation5 + $0x108] sm:$0xff]
    %v120 = vld [vmem:[#allocation5 + $0x110] sm:$0xff]
    %v121 = vld [vmem:[#allocation5 + $0x118] sm:$0xff]
    %v122 = vld [vmem:[#allocation5 + $0x120] sm:$0xff]
    %v123 = vld [vmem:[#allocation5 + $0x128] sm:$0xff]
    %v124 = vld [vmem:[#allocation5 + $0x130] sm:$0xff]
    %v125 = vld [vmem:[#allocation5 + $0x138] sm:$0xff]
    %v126 = vld [vmem:[#allocation5 + $0x140] sm:$0xff]
    %v127 = vld [vmem:[#allocation5 + $0x148] sm:$0xff]
    %v128 = vld [vmem:[#allocation5 + $0x150] sm:$0xff]
    %v129 = vld [vmem:[#allocation5 + $0x158] sm:$0xff]
    %v130 = vld [vmem:[#allocation5 + $0x160] sm:$0xff]
    %v131 = vld [vmem:[#allocation5 + $0x168] sm:$0xff]
    %v132 = vld [vmem:[#allocation5 + $0x170] sm:$0xff]
    %v133 = vld [vmem:[#allocation5 + $0x178] sm:$0xff]
    %v134 = vld [vmem:[#allocation5 + $0x180] sm:$0xff]
    %v135 = vld [vmem:[#allocation5 + $0x188] sm:$0xff]
    %v136 = vld [vmem:[#allocation5 + $0x190] sm:$0xff]
    %v137 = vld [vmem:[#allocation5 + $0x198] sm:$0xff]
    %v138 = vld [vmem:[#allocation5 + $0x1a0] sm:$0xff]
    %v139 = vld [vmem:[#allocation5 + $0x1a8] sm:$0xff]
    %v140 = vld [vmem:[#allocation5 + $0x1b0] sm:$0xff]
    %v141 = vld [vmem:[#allocation5 + $0x1b8] sm:$0xff]
    %v142 = vld [vmem:[#allocation5 + $0x1c0] sm:$0xff]
    %v143 = vld [vmem:[#allocation5 + $0x1c8] sm:$0xff]
    %v144 = vld [vmem:[#allocation5 + $0x1d0] sm:$0xff]
    %v145 = vld [vmem:[#allocation5 + $0x1d8] sm:$0xff]
    %v146 = vld [vmem:[#allocation5 + $0x1e0] sm:$0xff]
    %v147 = vld [vmem:[#allocation5 + $0x1e8] sm:$0xff]
    %v148 = vld [vmem:[#allocation5 + $0x1f0] sm:$0xff]
    %v149 = vld [vmem:[#allocation5 + $0x1f8] sm:$0xff]
    %v150 = vld [vmem:[#allocation5 + $0x200] sm:$0xff]
    %v151 = vld [vmem:[#allocation5 + $0x208] sm:$0xff]
    %v152 = vld [vmem:[#allocation5 + $0x210] sm:$0xff]
    %v153 = vld [vmem:[#allocation5 + $0x218] sm:$0xff]
    %v154 = vld [vmem:[#allocation5 + $0x220] sm:$0xff]
    %v155 = vld [vmem:[#allocation5 + $0x228] sm:$0xff]
    %v156 = vld [vmem:[#allocation5 + $0x230] sm:$0xff]
    %v157 = vld [vmem:[#allocation5 + $0x238] sm:$0xff]
    %v158 = vld [vmem:[#allocation5 + $0x240] sm:$0xff]
    %v159 = vld [vmem:[#allocation5 + $0x248] sm:$0xff]
    %v160 = vld [vmem:[#allocation5 + $0x250] sm:$0xff]
    %v161 = vld [vmem:[#allocation5 + $0x258] sm:$0xff]
    %v162 = vld [vmem:[#allocation5 + $0x260] sm:$0xff]
    %v163 = vld [vmem:[#allocation5 + $0x268] sm:$0xff]
    %v164 = vld [vmem:[#allocation5 + $0x270] sm:$0xff]
    %v165 = vld [vmem:[#allocation5 + $0x278] sm:$0xff]
    %v166 = vld [vmem:[#allocation5 + $0x280] sm:$0xff]
    %v167 = vld [vmem:[#allocation5 + $0x288] sm:$0xff]
    %v168 = vld [vmem:[#allocation5 + $0x290] sm:$0xff]
    %v169 = vld [vmem:[#allocation5 + $0x298] sm:$0xff]
    %v170 = vld [vmem:[#allocation5 + $0x2a0] sm:$0xff]
    %v171 = vld [vmem:[#allocation5 + $0x2a8] sm:$0xff]
    %v172 = vld [vmem:[#allocation5 + $0x2b0] sm:$0xff]
    %v173 = vld [vmem:[#allocation5 + $0x2b8] sm:$0xff]
    %v174 = vld [vmem:[#allocation5 + $0x2c0] sm:$0xff]
    %v175 = vld [vmem:[#allocation5 + $0x2c8] sm:$0xff]
    %v176 = vld [vmem:[#allocation5 + $0x2d0] sm:$0xff]
    %v177 = vld [vmem:[#allocation5 + $0x2d8] sm:$0xff]
    %v178 = vld [vmem:[#allocation5 + $0x2e0] sm:$0xff]
    %v179 = vld [vmem:[#allocation5 + $0x2e8] sm:$0xff]
    %v180 = vld [vmem:[#allocation5 + $0x2f0] sm:$0xff]
    %v181 = vld [vmem:[#allocation5 + $0x2f8] sm:$0xff]
    %v182 = vld [vmem:[#allocation5 + $0x300] sm:$0xff]
    %v183 = vld [vmem:[#allocation5 + $0x308] sm:$0xff]
    %v184 = vld [vmem:[#allocation5 + $0x310] sm:$0xff]
    %v185 = vld [vmem:[#allocation5 + $0x318] sm:$0xff]
    %v186 = vld [vmem:[#allocation5 + $0x320] sm:$0xff]
    %v187 = vld [vmem:[#allocation5 + $0x328] sm:$0xff]
    %v188 = vld [vmem:[#allocation5 + $0x330] sm:$0xff]
    %v189 = vld [vmem:[#allocation5 + $0x338] sm:$0xff]
    %v190 = vld [vmem:[#allocation5 + $0x340] sm:$0xff]
    %v191 = vld [vmem:[#allocation5 + $0x348] sm:$0xff]
    %v192 = vld [vmem:[#allocation5 + $0x350] sm:$0xff]
    %v193 = vld [vmem:[#allocation5 + $0x358] sm:$0xff]
    %v194 = vld [vmem:[#allocation5 + $0x360] sm:$0xff]
    %v195 = vld [vmem:[#allocation5 + $0x368] sm:$0xff]
    %v196 = vld [vmem:[#allocation5 + $0x370] sm:$0xff]
    %v197 = vld [vmem:[#allocation5 + $0x378] sm:$0xff]
    %v198 = vld [vmem:[#allocation5 + $0x380] sm:$0xff]
    %v199 = vld [vmem:[#allocation5 + $0x388] sm:$0xff]
    %v200 = vld [vmem:[#allocation5 + $0x390] sm:$0xff]
    %v201 = vld [vmem:[#allocation5 + $0x398] sm:$0xff]
    %v202 = vld [vmem:[#allocation5 + $0x3a0] sm:$0xff]
    %v203 = vld [vmem:[#allocation5 + $0x3a8] sm:$0xff]
    %v204 = vld [vmem:[#allocation5 + $0x3b0] sm:$0xff]
    %v205 = vld [vmem:[#allocation5 + $0x3b8] sm:$0xff]
    %v206 = vld [vmem:[#allocation5 + $0x3c0] sm:$0xff]
    %v207 = vld [vmem:[#allocation5 + $0x3c8] sm:$0xff]
    %v208 = vld [vmem:[#allocation5 + $0x3d0] sm:$0xff]
    %v209 = vld [vmem:[#allocation5 + $0x3d8] sm:$0xff]
    %v210 = vld [vmem:[#allocation5 + $0x3e0] sm:$0xff]
    %v211 = vld [vmem:[#allocation5 + $0x3e8] sm:$0xff]
    %v212 = vld [vmem:[#allocation5 + $0x3f0] sm:$0xff]
    %v213 = vld [vmem:[#allocation5 + $0x3f8] sm:$0xff]
    %v214 = vld [vmem:[#allocation5 + $0x400] sm:$0xff]
    %v215 = vld [vmem:[#allocation5 + $0x408] sm:$0xff]
    %v216 = vld [vmem:[#allocation5 + $0x410] sm:$0xff]
    %v217 = vld [vmem:[#allocation5 + $0x418] sm:$0xff]
    %v218 = vld [vmem:[#allocation5 + $0x420] sm:$0xff]
    %v219 = vld [vmem:[#allocation5 + $0x428] sm:$0xff]
    %v220 = vld [vmem:[#allocation5 + $0x430] sm:$0xff]
    %v221 = vld [vmem:[#allocation5 + $0x438] sm:$0xff]
    %v222 = vld [vmem:[#allocation5 + $0x440] sm:$0xff]
    %v223 = vld [vmem:[#allocation5 + $0x448] sm:$0xff]
    %v224 = vld [vmem:[#allocation5 + $0x450] sm:$0xff]
    %v225 = vld [vmem:[#allocation5 + $0x458] sm:$0xff]
    %v226 = vld [vmem:[#allocation5 + $0x460] sm:$0xff]
    %v227 = vld [vmem:[#allocation5 + $0x468] sm:$0xff]
    %v228 = vld [vmem:[#allocation5 + $0x470] sm:$0xff]
    %v229 = vld [vmem:[#allocation5 + $0x478] sm:$0xff]
    %v230 = vld [vmem:[#allocation5 + $0x480] sm:$0xff]
    %v231 = vld [vmem:[#allocation5 + $0x488] sm:$0xff]
    %v232 = vld [vmem:[#allocation5 + $0x490] sm:$0xff]
    %v233 = vld [vmem:[#allocation5 + $0x498] sm:$0xff]
    %v234 = vld [vmem:[#allocation5 + $0x4a0] sm:$0xff]
    %v235 = vld [vmem:[#allocation5 + $0x4a8] sm:$0xff]
    %v236 = vld [vmem:[#allocation5 + $0x4b0] sm:$0xff]
    %v237 = vld [vmem:[#allocation5 + $0x4b8] sm:$0xff]
    %v238 = vld [vmem:[#allocation5 + $0x4c0] sm:$0xff]
    %v239 = vld [vmem:[#allocation5 + $0x4c8] sm:$0xff]
    %v240 = vld [vmem:[#allocation5 + $0x4d0] sm:$0xff]
    %v241 = vld [vmem:[#allocation5 + $0x4d8] sm:$0xff]
    %v242 = vld [vmem:[#allocation5 + $0x4e0] sm:$0xff]
    %v243 = vld [vmem:[#allocation5 + $0x4e8] sm:$0xff]
    %v244 = vld [vmem:[#allocation5 + $0x4f0] sm:$0xff]
    %v245 = vld [vmem:[#allocation5 + $0x4f8] sm:$0xff]
    %v246 = vld [vmem:[#allocation5 + $0x500] sm:$0xff]
    %v247 = vld [vmem:[#allocation5 + $0x508] sm:$0xff]
    %v248 = vld [vmem:[#allocation5 + $0x510] sm:$0xff]
    %v249 = vld [vmem:[#allocation5 + $0x518] sm:$0xff]
    %v250 = vld [vmem:[#allocation5 + $0x520] sm:$0xff]
    %v251 = vld [vmem:[#allocation5 + $0x528] sm:$0xff]
    %v252 = vld [vmem:[#allocation5 + $0x530] sm:$0xff]
    %v253 = vld [vmem:[#allocation5 + $0x538] sm:$0xff]
    %v254 = vld [vmem:[#allocation5 + $0x540] sm:$0xff]
    %v255 = vld [vmem:[#allocation5 + $0x548] sm:$0xff]
    %v256 = vld [vmem:[#allocation5 + $0x550] sm:$0xff]
    %v257 = vld [vmem:[#allocation5 + $0x558] sm:$0xff]
    %v258 = vld [vmem:[#allocation5 + $0x560] sm:$0xff]
    %v259 = vld [vmem:[#allocation5 + $0x568] sm:$0xff]
    %v260 = vld [vmem:[#allocation5 + $0x570] sm:$0xff]
    %v261 = vld [vmem:[#allocation5 + $0x578] sm:$0xff]
    %v262 = vld [vmem:[#allocation5 + $0x580] sm:$0xff]
    %v263 = vld [vmem:[#allocation5 + $0x588] sm:$0xff]
    %v264 = vld [vmem:[#allocation5 + $0x590] sm:$0xff]
    %v265 = vld [vmem:[#allocation5 + $0x598] sm:$0xff]
    %v266 = vld [vmem:[#allocation5 + $0x5a0] sm:$0xff]
    %v267 = vld [vmem:[#allocation5 + $0x5a8] sm:$0xff]
    %v268 = vld [vmem:[#allocation5 + $0x5b0] sm:$0xff]
    %v269 = vld [vmem:[#allocation5 + $0x5b8] sm:$0xff]
    %v270 = vld [vmem:[#allocation5 + $0x5c0] sm:$0xff]
    %v271 = vld [vmem:[#allocation5 + $0x5c8] sm:$0xff]
    %v272 = vld [vmem:[#allocation5 + $0x5d0] sm:$0xff]
    %v273 = vld [vmem:[#allocation5 + $0x5d8] sm:$0xff]
    %v274 = vld [vmem:[#allocation5 + $0x5e0] sm:$0xff]
    %v275 = vld [vmem:[#allocation5 + $0x5e8] sm:$0xff]
    %v276 = vld [vmem:[#allocation5 + $0x5f0] sm:$0xff]
    %v277 = vld [vmem:[#allocation5 + $0x5f8] sm:$0xff]
    %v278 = vld [vmem:[#allocation5 + $0x600] sm:$0xff]
    %v279 = vld [vmem:[#allocation5 + $0x608] sm:$0xff]
    %v280 = vld [vmem:[#allocation5 + $0x610] sm:$0xff]
    %v281 = vld [vmem:[#allocation5 + $0x618] sm:$0xff]
    %v282 = vld [vmem:[#allocation5 + $0x620] sm:$0xff]
    %v283 = vld [vmem:[#allocation5 + $0x628] sm:$0xff]
    %v284 = vld [vmem:[#allocation5 + $0x630] sm:$0xff]
    %v285 = vld [vmem:[#allocation5 + $0x638] sm:$0xff]
    %v286 = vld [vmem:[#allocation5 + $0x640] sm:$0xff]
    %v287 = vld [vmem:[#allocation5 + $0x648] sm:$0xff]
    %v288 = vld [vmem:[#allocation5 + $0x650] sm:$0xff]
    %v289 = vld [vmem:[#allocation5 + $0x658] sm:$0xff]
    %v290 = vld [vmem:[#allocation5 + $0x660] sm:$0xff]
    %v291 = vld [vmem:[#allocation5 + $0x668] sm:$0xff]
    %v292 = vld [vmem:[#allocation5 + $0x670] sm:$0xff]
    %v293 = vld [vmem:[#allocation5 + $0x678] sm:$0xff]
    %v294 = vld [vmem:[#allocation5 + $0x680] sm:$0xff]
    %v295 = vld [vmem:[#allocation5 + $0x688] sm:$0xff]
    %v296 = vld [vmem:[#allocation5 + $0x690] sm:$0xff]
    %v297 = vld [vmem:[#allocation5 + $0x698] sm:$0xff]
    %v298 = vld [vmem:[#allocation5 + $0x6a0] sm:$0xff]
    %v299 = vld [vmem:[#allocation5 + $0x6a8] sm:$0xff]
    %v300 = vld [vmem:[#allocation5 + $0x6b0] sm:$0xff]
    %v301 = vld [vmem:[#allocation5 + $0x6b8] sm:$0xff]
    %v302 = vld [vmem:[#allocation5 + $0x6c0] sm:$0xff]
    %v303 = vld [vmem:[#allocation5 + $0x6c8] sm:$0xff]
    %v304 = vld [vmem:[#allocation5 + $0x6d0] sm:$0xff]
    %v305 = vld [vmem:[#allocation5 + $0x6d8] sm:$0xff]
    %v306 = vld [vmem:[#allocation5 + $0x6e0] sm:$0xff]
    %v307 = vld [vmem:[#allocation5 + $0x6e8] sm:$0xff]
    %v308 = vld [vmem:[#allocation5 + $0x6f0] sm:$0xff]
    %v309 = vld [vmem:[#allocation5 + $0x6f8] sm:$0xff]
    %v310 = vld [vmem:[#allocation5 + $0x700] sm:$0xff]
    %v311 = vld [vmem:[#allocation5 + $0x708] sm:$0xff]
    %v312 = vld [vmem:[#allocation5 + $0x710] sm:$0xff]
    %v313 = vld [vmem:[#allocation5 + $0x718] sm:$0xff]
    %v314 = vld [vmem:[#allocation5 + $0x720] sm:$0xff]
    %v315 = vld [vmem:[#allocation5 + $0x728] sm:$0xff]
    %v316 = vld [vmem:[#allocation5 + $0x730] sm:$0xff]
    %v317 = vld [vmem:[#allocation5 + $0x738] sm:$0xff]
    %v318 = vld [vmem:[#allocation5 + $0x740] sm:$0xff]
    %v319 = vld [vmem:[#allocation5 + $0x748] sm:$0xff]
    %v320 = vld [vmem:[#allocation5 + $0x750] sm:$0xff]
    %v321 = vld [vmem:[#allocation5 + $0x758] sm:$0xff]
    %v322 = vld [vmem:[#allocation5 + $0x760] sm:$0xff]
    %v323 = vld [vmem:[#allocation5 + $0x768] sm:$0xff]
    %v324 = vld [vmem:[#allocation5 + $0x770] sm:$0xff]
    %v325 = vld [vmem:[#allocation5 + $0x778] sm:$0xff]
    %v326 = vld [vmem:[#allocation5 + $0x780] sm:$0xff]
    %v327 = vld [vmem:[#allocation5 + $0x788] sm:$0xff]
    %v328 = vld [vmem:[#allocation5 + $0x790] sm:$0xff]
    %v329 = vld [vmem:[#allocation5 + $0x798] sm:$0xff]
    %v330 = vld [vmem:[#allocation5 + $0x7a0] sm:$0xff]
    %v331 = vld [vmem:[#allocation5 + $0x7a8] sm:$0xff]
    %v332 = vld [vmem:[#allocation5 + $0x7b0] sm:$0xff]
    %v333 = vld [vmem:[#allocation5 + $0x7b8] sm:$0xff]
    %v334 = vld [vmem:[#allocation5 + $0x7c0] sm:$0xff]
    %v335 = vld [vmem:[#allocation5 + $0x7c8] sm:$0xff]
    %v336 = vld [vmem:[#allocation5 + $0x7d0] sm:$0xff]
    %v337 = vld [vmem:[#allocation5 + $0x7d8] sm:$0xff]
    %v338 = vld [vmem:[#allocation5 + $0x7e0] sm:$0xff]
    %v339 = vld [vmem:[#allocation5 + $0x7e8] sm:$0xff]
    %v340 = vld [vmem:[#allocation5 + $0x7f0] sm:$0xff]
    %v341 = vld [vmem:[#allocation5 + $0x7f8] sm:$0xff]
    %v342 = vld [vmem:[#allocation7] sm:$0xff]
    %v344 = vlaneseq
    %v345 = vshrl.u32 %v344, 7
    %v346 = vsub.s32 0, %v345
    %v347 = vrot.slane %v342, %v346
    %v348 = vlaneseq
    %v349 = vshrl.u32 %v348, 7
    %v350 = vsub.s32 1, %v349
    %v351 = vrot.slane %v342, %v350
    %v352 = vlaneseq
    %v353 = vshrl.u32 %v352, 7
    %v354 = vsub.s32 2, %v353
    %v355 = vrot.slane %v342, %v354
    %v356 = vlaneseq
    %v357 = vshrl.u32 %v356, 7
    %v358 = vsub.s32 3, %v357
    %v359 = vrot.slane %v342, %v358
    %v360 = vlaneseq
    %v361 = vshrl.u32 %v360, 7
    %v362 = vsub.s32 4, %v361
    %v363 = vrot.slane %v342, %v362
    %v364 = vlaneseq
    %v365 = vshrl.u32 %v364, 7
    %v366 = vsub.s32 5, %v365
    %v367 = vrot.slane %v342, %v366
    %v368 = vlaneseq
    %v369 = vshrl.u32 %v368, 7
    %v370 = vsub.s32 6, %v369
    %v371 = vrot.slane %v342, %v370
    %v372 = vlaneseq
    %v373 = vshrl.u32 %v372, 7
    %v374 = vsub.s32 7, %v373
    %v375 = vrot.slane %v342, %v374
    %v416 = vunpack.c.l.b16 %v54
    %v417 = vunpack.c.h.b16 %v54
    %v418 = vunpack.c.l.b16 %v55
    %v419 = vunpack.c.h.b16 %v55
    %v420 = vunpack.c.l.b16 %v56
    %v421 = vunpack.c.h.b16 %v56
    %v422 = vunpack.c.l.b16 %v57
    %v423 = vunpack.c.h.b16 %v57
    %v424 = vunpack.c.l.b16 %v58
    %v425 = vunpack.c.h.b16 %v58
    %v426 = vunpack.c.l.b16 %v59
    %v427 = vunpack.c.h.b16 %v59
    %v428 = vunpack.c.l.b16 %v60
    %v429 = vunpack.c.h.b16 %v60
    %v430 = vunpack.c.l.b16 %v61
    %v431 = vunpack.c.h.b16 %v61
    %v432 = vunpack.c.l.b16 %v62
    %v433 = vunpack.c.h.b16 %v62
    %v434 = vunpack.c.l.b16 %v63
    %v435 = vunpack.c.h.b16 %v63
    %v436 = vunpack.c.l.b16 %v64
    %v437 = vunpack.c.h.b16 %v64
    %v438 = vunpack.c.l.b16 %v65
    %v439 = vunpack.c.h.b16 %v65
    %v440 = vunpack.c.l.b16 %v66
    %v441 = vunpack.c.h.b16 %v66
    %v442 = vunpack.c.l.b16 %v67
    %v443 = vunpack.c.h.b16 %v67
    %v444 = vunpack.c.l.b16 %v68
    %v445 = vunpack.c.h.b16 %v68
    %v446 = vunpack.c.l.b16 %v69
    %v447 = vunpack.c.h.b16 %v69
    %v448 = vunpack.c.l.b16 %v70
    %v449 = vunpack.c.h.b16 %v70
    %v450 = vunpack.c.l.b16 %v71
    %v451 = vunpack.c.h.b16 %v71
    %v452 = vunpack.c.l.b16 %v72
    %v453 = vunpack.c.h.b16 %v72
    %v454 = vunpack.c.l.b16 %v73
    %v455 = vunpack.c.h.b16 %v73
    %v456 = vunpack.c.l.b16 %v74
    %v457 = vunpack.c.h.b16 %v74
    %v458 = vunpack.c.l.b16 %v75
    %v459 = vunpack.c.h.b16 %v75
    %v460 = vunpack.c.l.b16 %v76
    %v461 = vunpack.c.h.b16 %v76
    %v462 = vunpack.c.l.b16 %v77
    %v463 = vunpack.c.h.b16 %v77
    %v464 = vunpack.c.l.b16 %v78
    %v465 = vunpack.c.h.b16 %v78
    %v466 = vunpack.c.l.b16 %v79
    %v467 = vunpack.c.h.b16 %v79
    %v468 = vunpack.c.l.b16 %v80
    %v469 = vunpack.c.h.b16 %v80
    %v470 = vunpack.c.l.b16 %v81
    %v471 = vunpack.c.h.b16 %v81
    %v472 = vunpack.c.l.b16 %v82
    %v473 = vunpack.c.h.b16 %v82
    %v474 = vunpack.c.l.b16 %v83
    %v475 = vunpack.c.h.b16 %v83
    %v476 = vunpack.c.l.b16 %v84
    %v477 = vunpack.c.h.b16 %v84
    %v478 = vunpack.c.l.b16 %v85
    %v479 = vunpack.c.h.b16 %v85
    %v480 = vpack.c.b16 %v420, %v416
    %v481 = vpack.c.b16 %v421, %v417
    %v482 = vpack.c.b16 %v422, %v418
    %v483 = vpack.c.b16 %v423, %v419
    %v484 = vpack.c.b16 %v428, %v424
    %v485 = vpack.c.b16 %v429, %v425
    %v486 = vpack.c.b16 %v430, %v426
    %v487 = vpack.c.b16 %v431, %v427
    %v488 = vpack.c.b16 %v436, %v432
    %v489 = vpack.c.b16 %v437, %v433
    %v490 = vpack.c.b16 %v438, %v434
    %v491 = vpack.c.b16 %v439, %v435
    %v492 = vpack.c.b16 %v444, %v440
    %v493 = vpack.c.b16 %v445, %v441
    %v494 = vpack.c.b16 %v446, %v442
    %v495 = vpack.c.b16 %v447, %v443
    %v496 = vpack.c.b16 %v452, %v448
    %v497 = vpack.c.b16 %v453, %v449
    %v498 = vpack.c.b16 %v454, %v450
    %v499 = vpack.c.b16 %v455, %v451
    %v500 = vpack.c.b16 %v460, %v456
    %v501 = vpack.c.b16 %v461, %v457
    %v502 = vpack.c.b16 %v462, %v458
    %v503 = vpack.c.b16 %v463, %v459
    %v504 = vpack.c.b16 %v468, %v464
    %v505 = vpack.c.b16 %v469, %v465
    %v506 = vpack.c.b16 %v470, %v466
    %v507 = vpack.c.b16 %v471, %v467
    %v508 = vpack.c.b16 %v476, %v472
    %v509 = vpack.c.b16 %v477, %v473
    %v510 = vpack.c.b16 %v478, %v474
    %v511 = vpack.c.b16 %v479, %v475
    %v800 = vunpack.c.l.b16 %v86
    %v801 = vunpack.c.h.b16 %v86
    %v802 = vunpack.c.l.b16 %v87
    %v803 = vunpack.c.h.b16 %v87
    %v804 = vunpack.c.l.b16 %v88
    %v805 = vunpack.c.h.b16 %v88
    %v806 = vunpack.c.l.b16 %v89
    %v807 = vunpack.c.h.b16 %v89
    %v808 = vunpack.c.l.b16 %v90
    %v809 = vunpack.c.h.b16 %v90
    %v810 = vunpack.c.l.b16 %v91
    %v811 = vunpack.c.h.b16 %v91
    %v812 = vunpack.c.l.b16 %v92
    %v813 = vunpack.c.h.b16 %v92
    %v814 = vunpack.c.l.b16 %v93
    %v815 = vunpack.c.h.b16 %v93
    %v816 = vunpack.c.l.b16 %v94
    %v817 = vunpack.c.h.b16 %v94
    %v818 = vunpack.c.l.b16 %v95
    %v819 = vunpack.c.h.b16 %v95
    %v820 = vunpack.c.l.b16 %v96
    %v821 = vunpack.c.h.b16 %v96
    %v822 = vunpack.c.l.b16 %v97
    %v823 = vunpack.c.h.b16 %v97
    %v824 = vunpack.c.l.b16 %v98
    %v825 = vunpack.c.h.b16 %v98
    %v826 = vunpack.c.l.b16 %v99
    %v827 = vunpack.c.h.b16 %v99
    %v828 = vunpack.c.l.b16 %v100
    %v829 = vunpack.c.h.b16 %v100
    %v830 = vunpack.c.l.b16 %v101
    %v831 = vunpack.c.h.b16 %v101
    %v832 = vunpack.c.l.b16 %v102
    %v833 = vunpack.c.h.b16 %v102
    %v834 = vunpack.c.l.b16 %v103
    %v835 = vunpack.c.h.b16 %v103
    %v836 = vunpack.c.l.b16 %v104
    %v837 = vunpack.c.h.b16 %v104
    %v838 = vunpack.c.l.b16 %v105
    %v839 = vunpack.c.h.b16 %v105
    %v840 = vunpack.c.l.b16 %v106
    %v841 = vunpack.c.h.b16 %v106
    %v842 = vunpack.c.l.b16 %v107
    %v843 = vunpack.c.h.b16 %v107
    %v844 = vunpack.c.l.b16 %v108
    %v845 = vunpack.c.h.b16 %v108
    %v846 = vunpack.c.l.b16 %v109
    %v847 = vunpack.c.h.b16 %v109
    %v848 = vunpack.c.l.b16 %v110
    %v849 = vunpack.c.h.b16 %v110
    %v850 = vunpack.c.l.b16 %v111
    %v851 = vunpack.c.h.b16 %v111
    %v852 = vunpack.c.l.b16 %v112
    %v853 = vunpack.c.h.b16 %v112
    %v854 = vunpack.c.l.b16 %v113
    %v855 = vunpack.c.h.b16 %v113
    %v856 = vunpack.c.l.b16 %v114
    %v857 = vunpack.c.h.b16 %v114
    %v858 = vunpack.c.l.b16 %v115
    %v859 = vunpack.c.h.b16 %v115
    %v860 = vunpack.c.l.b16 %v116
    %v861 = vunpack.c.h.b16 %v116
    %v862 = vunpack.c.l.b16 %v117
    %v863 = vunpack.c.h.b16 %v117
    %v864 = vunpack.c.l.b16 %v118
    %v865 = vunpack.c.h.b16 %v118
    %v866 = vunpack.c.l.b16 %v119
    %v867 = vunpack.c.h.b16 %v119
    %v868 = vunpack.c.l.b16 %v120
    %v869 = vunpack.c.h.b16 %v120
    %v870 = vunpack.c.l.b16 %v121
    %v871 = vunpack.c.h.b16 %v121
    %v872 = vunpack.c.l.b16 %v122
    %v873 = vunpack.c.h.b16 %v122
    %v874 = vunpack.c.l.b16 %v123
    %v875 = vunpack.c.h.b16 %v123
    %v876 = vunpack.c.l.b16 %v124
    %v877 = vunpack.c.h.b16 %v124
    %v878 = vunpack.c.l.b16 %v125
    %v879 = vunpack.c.h.b16 %v125
    %v880 = vunpack.c.l.b16 %v126
    %v881 = vunpack.c.h.b16 %v126
    %v882 = vunpack.c.l.b16 %v127
    %v883 = vunpack.c.h.b16 %v127
    %v884 = vunpack.c.l.b16 %v128
    %v885 = vunpack.c.h.b16 %v128
    %v886 = vunpack.c.l.b16 %v129
    %v887 = vunpack.c.h.b16 %v129
    %v888 = vunpack.c.l.b16 %v130
    %v889 = vunpack.c.h.b16 %v130
    %v890 = vunpack.c.l.b16 %v131
    %v891 = vunpack.c.h.b16 %v131
    %v892 = vunpack.c.l.b16 %v132
    %v893 = vunpack.c.h.b16 %v132
    %v894 = vunpack.c.l.b16 %v133
    %v895 = vunpack.c.h.b16 %v133
    %v896 = vunpack.c.l.b16 %v134
    %v897 = vunpack.c.h.b16 %v134
    %v898 = vunpack.c.l.b16 %v135
    %v899 = vunpack.c.h.b16 %v135
    %v900 = vunpack.c.l.b16 %v136
    %v901 = vunpack.c.h.b16 %v136
    %v902 = vunpack.c.l.b16 %v137
    %v903 = vunpack.c.h.b16 %v137
    %v904 = vunpack.c.l.b16 %v138
    %v905 = vunpack.c.h.b16 %v138
    %v906 = vunpack.c.l.b16 %v139
    %v907 = vunpack.c.h.b16 %v139
    %v908 = vunpack.c.l.b16 %v140
    %v909 = vunpack.c.h.b16 %v140
    %v910 = vunpack.c.l.b16 %v141
    %v911 = vunpack.c.h.b16 %v141
    %v912 = vunpack.c.l.b16 %v142
    %v913 = vunpack.c.h.b16 %v142
    %v914 = vunpack.c.l.b16 %v143
    %v915 = vunpack.c.h.b16 %v143
    %v916 = vunpack.c.l.b16 %v144
    %v917 = vunpack.c.h.b16 %v144
    %v918 = vunpack.c.l.b16 %v145
    %v919 = vunpack.c.h.b16 %v145
    %v920 = vunpack.c.l.b16 %v146
    %v921 = vunpack.c.h.b16 %v146
    %v922 = vunpack.c.l.b16 %v147
    %v923 = vunpack.c.h.b16 %v147
    %v924 = vunpack.c.l.b16 %v148
    %v925 = vunpack.c.h.b16 %v148
    %v926 = vunpack.c.l.b16 %v149
    %v927 = vunpack.c.h.b16 %v149
    %v928 = vunpack.c.l.b16 %v150
    %v929 = vunpack.c.h.b16 %v150
    %v930 = vunpack.c.l.b16 %v151
    %v931 = vunpack.c.h.b16 %v151
    %v932 = vunpack.c.l.b16 %v152
    %v933 = vunpack.c.h.b16 %v152
    %v934 = vunpack.c.l.b16 %v153
    %v935 = vunpack.c.h.b16 %v153
    %v936 = vunpack.c.l.b16 %v154
    %v937 = vunpack.c.h.b16 %v154
    %v938 = vunpack.c.l.b16 %v155
    %v939 = vunpack.c.h.b16 %v155
    %v940 = vunpack.c.l.b16 %v156
    %v941 = vunpack.c.h.b16 %v156
    %v942 = vunpack.c.l.b16 %v157
    %v943 = vunpack.c.h.b16 %v157
    %v944 = vunpack.c.l.b16 %v158
    %v945 = vunpack.c.h.b16 %v158
    %v946 = vunpack.c.l.b16 %v159
    %v947 = vunpack.c.h.b16 %v159
    %v948 = vunpack.c.l.b16 %v160
    %v949 = vunpack.c.h.b16 %v160
    %v950 = vunpack.c.l.b16 %v161
    %v951 = vunpack.c.h.b16 %v161
    %v952 = vunpack.c.l.b16 %v162
    %v953 = vunpack.c.h.b16 %v162
    %v954 = vunpack.c.l.b16 %v163
    %v955 = vunpack.c.h.b16 %v163
    %v956 = vunpack.c.l.b16 %v164
    %v957 = vunpack.c.h.b16 %v164
    %v958 = vunpack.c.l.b16 %v165
    %v959 = vunpack.c.h.b16 %v165
    %v960 = vunpack.c.l.b16 %v166
    %v961 = vunpack.c.h.b16 %v166
    %v962 = vunpack.c.l.b16 %v167
    %v963 = vunpack.c.h.b16 %v167
    %v964 = vunpack.c.l.b16 %v168
    %v965 = vunpack.c.h.b16 %v168
    %v966 = vunpack.c.l.b16 %v169
    %v967 = vunpack.c.h.b16 %v169
    %v968 = vunpack.c.l.b16 %v170
    %v969 = vunpack.c.h.b16 %v170
    %v970 = vunpack.c.l.b16 %v171
    %v971 = vunpack.c.h.b16 %v171
    %v972 = vunpack.c.l.b16 %v172
    %v973 = vunpack.c.h.b16 %v172
    %v974 = vunpack.c.l.b16 %v173
    %v975 = vunpack.c.h.b16 %v173
    %v976 = vunpack.c.l.b16 %v174
    %v977 = vunpack.c.h.b16 %v174
    %v978 = vunpack.c.l.b16 %v175
    %v979 = vunpack.c.h.b16 %v175
    %v980 = vunpack.c.l.b16 %v176
    %v981 = vunpack.c.h.b16 %v176
    %v982 = vunpack.c.l.b16 %v177
    %v983 = vunpack.c.h.b16 %v177
    %v984 = vunpack.c.l.b16 %v178
    %v985 = vunpack.c.h.b16 %v178
    %v986 = vunpack.c.l.b16 %v179
    %v987 = vunpack.c.h.b16 %v179
    %v988 = vunpack.c.l.b16 %v180
    %v989 = vunpack.c.h.b16 %v180
    %v990 = vunpack.c.l.b16 %v181
    %v991 = vunpack.c.h.b16 %v181
    %v992 = vunpack.c.l.b16 %v182
    %v993 = vunpack.c.h.b16 %v182
    %v994 = vunpack.c.l.b16 %v183
    %v995 = vunpack.c.h.b16 %v183
    %v996 = vunpack.c.l.b16 %v184
    %v997 = vunpack.c.h.b16 %v184
    %v998 = vunpack.c.l.b16 %v185
    %v999 = vunpack.c.h.b16 %v185
    %v1000 = vunpack.c.l.b16 %v186
    %v1001 = vunpack.c.h.b16 %v186
    %v1002 = vunpack.c.l.b16 %v187
    %v1003 = vunpack.c.h.b16 %v187
    %v1004 = vunpack.c.l.b16 %v188
    %v1005 = vunpack.c.h.b16 %v188
    %v1006 = vunpack.c.l.b16 %v189
    %v1007 = vunpack.c.h.b16 %v189
    %v1008 = vunpack.c.l.b16 %v190
    %v1009 = vunpack.c.h.b16 %v190
    %v1010 = vunpack.c.l.b16 %v191
    %v1011 = vunpack.c.h.b16 %v191
    %v1012 = vunpack.c.l.b16 %v192
    %v1013 = vunpack.c.h.b16 %v192
    %v1014 = vunpack.c.l.b16 %v193
    %v1015 = vunpack.c.h.b16 %v193
    %v1016 = vunpack.c.l.b16 %v194
    %v1017 = vunpack.c.h.b16 %v194
    %v1018 = vunpack.c.l.b16 %v195
    %v1019 = vunpack.c.h.b16 %v195
    %v1020 = vunpack.c.l.b16 %v196
    %v1021 = vunpack.c.h.b16 %v196
    %v1022 = vunpack.c.l.b16 %v197
    %v1023 = vunpack.c.h.b16 %v197
    %v1024 = vunpack.c.l.b16 %v198
    %v1025 = vunpack.c.h.b16 %v198
    %v1026 = vunpack.c.l.b16 %v199
    %v1027 = vunpack.c.h.b16 %v199
    %v1028 = vunpack.c.l.b16 %v200
    %v1029 = vunpack.c.h.b16 %v200
    %v1030 = vunpack.c.l.b16 %v201
    %v1031 = vunpack.c.h.b16 %v201
    %v1032 = vunpack.c.l.b16 %v202
    %v1033 = vunpack.c.h.b16 %v202
    %v1034 = vunpack.c.l.b16 %v203
    %v1035 = vunpack.c.h.b16 %v203
    %v1036 = vunpack.c.l.b16 %v204
    %v1037 = vunpack.c.h.b16 %v204
    %v1038 = vunpack.c.l.b16 %v205
    %v1039 = vunpack.c.h.b16 %v205
    %v1040 = vunpack.c.l.b16 %v206
    %v1041 = vunpack.c.h.b16 %v206
    %v1042 = vunpack.c.l.b16 %v207
    %v1043 = vunpack.c.h.b16 %v207
    %v1044 = vunpack.c.l.b16 %v208
    %v1045 = vunpack.c.h.b16 %v208
    %v1046 = vunpack.c.l.b16 %v209
    %v1047 = vunpack.c.h.b16 %v209
    %v1048 = vunpack.c.l.b16 %v210
    %v1049 = vunpack.c.h.b16 %v210
    %v1050 = vunpack.c.l.b16 %v211
    %v1051 = vunpack.c.h.b16 %v211
    %v1052 = vunpack.c.l.b16 %v212
    %v1053 = vunpack.c.h.b16 %v212
    %v1054 = vunpack.c.l.b16 %v213
    %v1055 = vunpack.c.h.b16 %v213
    %v1056 = vunpack.c.l.b16 %v214
    %v1057 = vunpack.c.h.b16 %v214
    %v1058 = vunpack.c.l.b16 %v215
    %v1059 = vunpack.c.h.b16 %v215
    %v1060 = vunpack.c.l.b16 %v216
    %v1061 = vunpack.c.h.b16 %v216
    %v1062 = vunpack.c.l.b16 %v217
    %v1063 = vunpack.c.h.b16 %v217
    %v1064 = vunpack.c.l.b16 %v218
    %v1065 = vunpack.c.h.b16 %v218
    %v1066 = vunpack.c.l.b16 %v219
    %v1067 = vunpack.c.h.b16 %v219
    %v1068 = vunpack.c.l.b16 %v220
    %v1069 = vunpack.c.h.b16 %v220
    %v1070 = vunpack.c.l.b16 %v221
    %v1071 = vunpack.c.h.b16 %v221
    %v1072 = vunpack.c.l.b16 %v222
    %v1073 = vunpack.c.h.b16 %v222
    %v1074 = vunpack.c.l.b16 %v223
    %v1075 = vunpack.c.h.b16 %v223
    %v1076 = vunpack.c.l.b16 %v224
    %v1077 = vunpack.c.h.b16 %v224
    %v1078 = vunpack.c.l.b16 %v225
    %v1079 = vunpack.c.h.b16 %v225
    %v1080 = vunpack.c.l.b16 %v226
    %v1081 = vunpack.c.h.b16 %v226
    %v1082 = vunpack.c.l.b16 %v227
    %v1083 = vunpack.c.h.b16 %v227
    %v1084 = vunpack.c.l.b16 %v228
    %v1085 = vunpack.c.h.b16 %v228
    %v1086 = vunpack.c.l.b16 %v229
    %v1087 = vunpack.c.h.b16 %v229
    %v1088 = vunpack.c.l.b16 %v230
    %v1089 = vunpack.c.h.b16 %v230
    %v1090 = vunpack.c.l.b16 %v231
    %v1091 = vunpack.c.h.b16 %v231
    %v1092 = vunpack.c.l.b16 %v232
    %v1093 = vunpack.c.h.b16 %v232
    %v1094 = vunpack.c.l.b16 %v233
    %v1095 = vunpack.c.h.b16 %v233
    %v1096 = vunpack.c.l.b16 %v234
    %v1097 = vunpack.c.h.b16 %v234
    %v1098 = vunpack.c.l.b16 %v235
    %v1099 = vunpack.c.h.b16 %v235
    %v1100 = vunpack.c.l.b16 %v236
    %v1101 = vunpack.c.h.b16 %v236
    %v1102 = vunpack.c.l.b16 %v237
    %v1103 = vunpack.c.h.b16 %v237
    %v1104 = vunpack.c.l.b16 %v238
    %v1105 = vunpack.c.h.b16 %v238
    %v1106 = vunpack.c.l.b16 %v239
    %v1107 = vunpack.c.h.b16 %v239
    %v1108 = vunpack.c.l.b16 %v240
    %v1109 = vunpack.c.h.b16 %v240
    %v1110 = vunpack.c.l.b16 %v241
    %v1111 = vunpack.c.h.b16 %v241
    %v1112 = vunpack.c.l.b16 %v242
    %v1113 = vunpack.c.h.b16 %v242
    %v1114 = vunpack.c.l.b16 %v243
    %v1115 = vunpack.c.h.b16 %v243
    %v1116 = vunpack.c.l.b16 %v244
    %v1117 = vunpack.c.h.b16 %v244
    %v1118 = vunpack.c.l.b16 %v245
    %v1119 = vunpack.c.h.b16 %v245
    %v1120 = vunpack.c.l.b16 %v246
    %v1121 = vunpack.c.h.b16 %v246
    %v1122 = vunpack.c.l.b16 %v247
    %v1123 = vunpack.c.h.b16 %v247
    %v1124 = vunpack.c.l.b16 %v248
    %v1125 = vunpack.c.h.b16 %v248
    %v1126 = vunpack.c.l.b16 %v249
    %v1127 = vunpack.c.h.b16 %v249
    %v1128 = vunpack.c.l.b16 %v250
    %v1129 = vunpack.c.h.b16 %v250
    %v1130 = vunpack.c.l.b16 %v251
    %v1131 = vunpack.c.h.b16 %v251
    %v1132 = vunpack.c.l.b16 %v252
    %v1133 = vunpack.c.h.b16 %v252
    %v1134 = vunpack.c.l.b16 %v253
    %v1135 = vunpack.c.h.b16 %v253
    %v1136 = vunpack.c.l.b16 %v254
    %v1137 = vunpack.c.h.b16 %v254
    %v1138 = vunpack.c.l.b16 %v255
    %v1139 = vunpack.c.h.b16 %v255
    %v1140 = vunpack.c.l.b16 %v256
    %v1141 = vunpack.c.h.b16 %v256
    %v1142 = vunpack.c.l.b16 %v257
    %v1143 = vunpack.c.h.b16 %v257
    %v1144 = vunpack.c.l.b16 %v258
    %v1145 = vunpack.c.h.b16 %v258
    %v1146 = vunpack.c.l.b16 %v259
    %v1147 = vunpack.c.h.b16 %v259
    %v1148 = vunpack.c.l.b16 %v260
    %v1149 = vunpack.c.h.b16 %v260
    %v1150 = vunpack.c.l.b16 %v261
    %v1151 = vunpack.c.h.b16 %v261
    %v1152 = vunpack.c.l.b16 %v262
    %v1153 = vunpack.c.h.b16 %v262
    %v1154 = vunpack.c.l.b16 %v263
    %v1155 = vunpack.c.h.b16 %v263
    %v1156 = vunpack.c.l.b16 %v264
    %v1157 = vunpack.c.h.b16 %v264
    %v1158 = vunpack.c.l.b16 %v265
    %v1159 = vunpack.c.h.b16 %v265
    %v1160 = vunpack.c.l.b16 %v266
    %v1161 = vunpack.c.h.b16 %v266
    %v1162 = vunpack.c.l.b16 %v267
    %v1163 = vunpack.c.h.b16 %v267
    %v1164 = vunpack.c.l.b16 %v268
    %v1165 = vunpack.c.h.b16 %v268
    %v1166 = vunpack.c.l.b16 %v269
    %v1167 = vunpack.c.h.b16 %v269
    %v1168 = vunpack.c.l.b16 %v270
    %v1169 = vunpack.c.h.b16 %v270
    %v1170 = vunpack.c.l.b16 %v271
    %v1171 = vunpack.c.h.b16 %v271
    %v1172 = vunpack.c.l.b16 %v272
    %v1173 = vunpack.c.h.b16 %v272
    %v1174 = vunpack.c.l.b16 %v273
    %v1175 = vunpack.c.h.b16 %v273
    %v1176 = vunpack.c.l.b16 %v274
    %v1177 = vunpack.c.h.b16 %v274
    %v1178 = vunpack.c.l.b16 %v275
    %v1179 = vunpack.c.h.b16 %v275
    %v1180 = vunpack.c.l.b16 %v276
    %v1181 = vunpack.c.h.b16 %v276
    %v1182 = vunpack.c.l.b16 %v277
    %v1183 = vunpack.c.h.b16 %v277
    %v1184 = vunpack.c.l.b16 %v278
    %v1185 = vunpack.c.h.b16 %v278
    %v1186 = vunpack.c.l.b16 %v279
    %v1187 = vunpack.c.h.b16 %v279
    %v1188 = vunpack.c.l.b16 %v280
    %v1189 = vunpack.c.h.b16 %v280
    %v1190 = vunpack.c.l.b16 %v281
    %v1191 = vunpack.c.h.b16 %v281
    %v1192 = vunpack.c.l.b16 %v282
    %v1193 = vunpack.c.h.b16 %v282
    %v1194 = vunpack.c.l.b16 %v283
    %v1195 = vunpack.c.h.b16 %v283
    %v1196 = vunpack.c.l.b16 %v284
    %v1197 = vunpack.c.h.b16 %v284
    %v1198 = vunpack.c.l.b16 %v285
    %v1199 = vunpack.c.h.b16 %v285
    %v1200 = vunpack.c.l.b16 %v286
    %v1201 = vunpack.c.h.b16 %v286
    %v1202 = vunpack.c.l.b16 %v287
    %v1203 = vunpack.c.h.b16 %v287
    %v1204 = vunpack.c.l.b16 %v288
    %v1205 = vunpack.c.h.b16 %v288
    %v1206 = vunpack.c.l.b16 %v289
    %v1207 = vunpack.c.h.b16 %v289
    %v1208 = vunpack.c.l.b16 %v290
    %v1209 = vunpack.c.h.b16 %v290
    %v1210 = vunpack.c.l.b16 %v291
    %v1211 = vunpack.c.h.b16 %v291
    %v1212 = vunpack.c.l.b16 %v292
    %v1213 = vunpack.c.h.b16 %v292
    %v1214 = vunpack.c.l.b16 %v293
    %v1215 = vunpack.c.h.b16 %v293
    %v1216 = vunpack.c.l.b16 %v294
    %v1217 = vunpack.c.h.b16 %v294
    %v1218 = vunpack.c.l.b16 %v295
    %v1219 = vunpack.c.h.b16 %v295
    %v1220 = vunpack.c.l.b16 %v296
    %v1221 = vunpack.c.h.b16 %v296
    %v1222 = vunpack.c.l.b16 %v297
    %v1223 = vunpack.c.h.b16 %v297
    %v1224 = vunpack.c.l.b16 %v298
    %v1225 = vunpack.c.h.b16 %v298
    %v1226 = vunpack.c.l.b16 %v299
    %v1227 = vunpack.c.h.b16 %v299
    %v1228 = vunpack.c.l.b16 %v300
    %v1229 = vunpack.c.h.b16 %v300
    %v1230 = vunpack.c.l.b16 %v301
    %v1231 = vunpack.c.h.b16 %v301
    %v1232 = vunpack.c.l.b16 %v302
    %v1233 = vunpack.c.h.b16 %v302
    %v1234 = vunpack.c.l.b16 %v303
    %v1235 = vunpack.c.h.b16 %v303
    %v1236 = vunpack.c.l.b16 %v304
    %v1237 = vunpack.c.h.b16 %v304
    %v1238 = vunpack.c.l.b16 %v305
    %v1239 = vunpack.c.h.b16 %v305
    %v1240 = vunpack.c.l.b16 %v306
    %v1241 = vunpack.c.h.b16 %v306
    %v1242 = vunpack.c.l.b16 %v307
    %v1243 = vunpack.c.h.b16 %v307
    %v1244 = vunpack.c.l.b16 %v308
    %v1245 = vunpack.c.h.b16 %v308
    %v1246 = vunpack.c.l.b16 %v309
    %v1247 = vunpack.c.h.b16 %v309
    %v1248 = vunpack.c.l.b16 %v310
    %v1249 = vunpack.c.h.b16 %v310
    %v1250 = vunpack.c.l.b16 %v311
    %v1251 = vunpack.c.h.b16 %v311
    %v1252 = vunpack.c.l.b16 %v312
    %v1253 = vunpack.c.h.b16 %v312
    %v1254 = vunpack.c.l.b16 %v313
    %v1255 = vunpack.c.h.b16 %v313
    %v1256 = vunpack.c.l.b16 %v314
    %v1257 = vunpack.c.h.b16 %v314
    %v1258 = vunpack.c.l.b16 %v315
    %v1259 = vunpack.c.h.b16 %v315
    %v1260 = vunpack.c.l.b16 %v316
    %v1261 = vunpack.c.h.b16 %v316
    %v1262 = vunpack.c.l.b16 %v317
    %v1263 = vunpack.c.h.b16 %v317
    %v1264 = vunpack.c.l.b16 %v318
    %v1265 = vunpack.c.h.b16 %v318
    %v1266 = vunpack.c.l.b16 %v319
    %v1267 = vunpack.c.h.b16 %v319
    %v1268 = vunpack.c.l.b16 %v320
    %v1269 = vunpack.c.h.b16 %v320
    %v1270 = vunpack.c.l.b16 %v321
    %v1271 = vunpack.c.h.b16 %v321
    %v1272 = vunpack.c.l.b16 %v322
    %v1273 = vunpack.c.h.b16 %v322
    %v1274 = vunpack.c.l.b16 %v323
    %v1275 = vunpack.c.h.b16 %v323
    %v1276 = vunpack.c.l.b16 %v324
    %v1277 = vunpack.c.h.b16 %v324
    %v1278 = vunpack.c.l.b16 %v325
    %v1279 = vunpack.c.h.b16 %v325
    %v1280 = vunpack.c.l.b16 %v326
    %v1281 = vunpack.c.h.b16 %v326
    %v1282 = vunpack.c.l.b16 %v327
    %v1283 = vunpack.c.h.b16 %v327
    %v1284 = vunpack.c.l.b16 %v328
    %v1285 = vunpack.c.h.b16 %v328
    %v1286 = vunpack.c.l.b16 %v329
    %v1287 = vunpack.c.h.b16 %v329
    %v1288 = vunpack.c.l.b16 %v330
    %v1289 = vunpack.c.h.b16 %v330
    %v1290 = vunpack.c.l.b16 %v331
    %v1291 = vunpack.c.h.b16 %v331
    %v1292 = vunpack.c.l.b16 %v332
    %v1293 = vunpack.c.h.b16 %v332
    %v1294 = vunpack.c.l.b16 %v333
    %v1295 = vunpack.c.h.b16 %v333
    %v1296 = vunpack.c.l.b16 %v334
    %v1297 = vunpack.c.h.b16 %v334
    %v1298 = vunpack.c.l.b16 %v335
    %v1299 = vunpack.c.h.b16 %v335
    %v1300 = vunpack.c.l.b16 %v336
    %v1301 = vunpack.c.h.b16 %v336
    %v1302 = vunpack.c.l.b16 %v337
    %v1303 = vunpack.c.h.b16 %v337
    %v1304 = vunpack.c.l.b16 %v338
    %v1305 = vunpack.c.h.b16 %v338
    %v1306 = vunpack.c.l.b16 %v339
    %v1307 = vunpack.c.h.b16 %v339
    %v1308 = vunpack.c.l.b16 %v340
    %v1309 = vunpack.c.h.b16 %v340
    %v1310 = vunpack.c.l.b16 %v341
    %v1311 = vunpack.c.h.b16 %v341
    %v1312 = vpack.c.b16 %v808, %v800
    %v1313 = vpack.c.b16 %v809, %v801
    %v1314 = vpack.c.b16 %v810, %v802
    %v1315 = vpack.c.b16 %v811, %v803
    %v1316 = vpack.c.b16 %v812, %v804
    %v1317 = vpack.c.b16 %v813, %v805
    %v1318 = vpack.c.b16 %v814, %v806
    %v1319 = vpack.c.b16 %v815, %v807
    %v1320 = vpack.c.b16 %v824, %v816
    %v1321 = vpack.c.b16 %v825, %v817
    %v1322 = vpack.c.b16 %v826, %v818
    %v1323 = vpack.c.b16 %v827, %v819
    %v1324 = vpack.c.b16 %v828, %v820
    %v1325 = vpack.c.b16 %v829, %v821
    %v1326 = vpack.c.b16 %v830, %v822
    %v1327 = vpack.c.b16 %v831, %v823
    %v1328 = vpack.c.b16 %v840, %v832
    %v1329 = vpack.c.b16 %v841, %v833
    %v1330 = vpack.c.b16 %v842, %v834
    %v1331 = vpack.c.b16 %v843, %v835
    %v1332 = vpack.c.b16 %v844, %v836
    %v1333 = vpack.c.b16 %v845, %v837
    %v1334 = vpack.c.b16 %v846, %v838
    %v1335 = vpack.c.b16 %v847, %v839
    %v1336 = vpack.c.b16 %v856, %v848
    %v1337 = vpack.c.b16 %v857, %v849
    %v1338 = vpack.c.b16 %v858, %v850
    %v1339 = vpack.c.b16 %v859, %v851
    %v1340 = vpack.c.b16 %v860, %v852
    %v1341 = vpack.c.b16 %v861, %v853
    %v1342 = vpack.c.b16 %v862, %v854
    %v1343 = vpack.c.b16 %v863, %v855
    %v1344 = vpack.c.b16 %v872, %v864
    %v1345 = vpack.c.b16 %v873, %v865
    %v1346 = vpack.c.b16 %v874, %v866
    %v1347 = vpack.c.b16 %v875, %v867
    %v1348 = vpack.c.b16 %v876, %v868
    %v1349 = vpack.c.b16 %v877, %v869
    %v1350 = vpack.c.b16 %v878, %v870
    %v1351 = vpack.c.b16 %v879, %v871
    %v1352 = vpack.c.b16 %v888, %v880
    %v1353 = vpack.c.b16 %v889, %v881
    %v1354 = vpack.c.b16 %v890, %v882
    %v1355 = vpack.c.b16 %v891, %v883
    %v1356 = vpack.c.b16 %v892, %v884
    %v1357 = vpack.c.b16 %v893, %v885
    %v1358 = vpack.c.b16 %v894, %v886
    %v1359 = vpack.c.b16 %v895, %v887
    %v1360 = vpack.c.b16 %v904, %v896
    %v1361 = vpack.c.b16 %v905, %v897
    %v1362 = vpack.c.b16 %v906, %v898
    %v1363 = vpack.c.b16 %v907, %v899
    %v1364 = vpack.c.b16 %v908, %v900
    %v1365 = vpack.c.b16 %v909, %v901
    %v1366 = vpack.c.b16 %v910, %v902
    %v1367 = vpack.c.b16 %v911, %v903
    %v1368 = vpack.c.b16 %v920, %v912
    %v1369 = vpack.c.b16 %v921, %v913
    %v1370 = vpack.c.b16 %v922, %v914
    %v1371 = vpack.c.b16 %v923, %v915
    %v1372 = vpack.c.b16 %v924, %v916
    %v1373 = vpack.c.b16 %v925, %v917
    %v1374 = vpack.c.b16 %v926, %v918
    %v1375 = vpack.c.b16 %v927, %v919
    %v1376 = vpack.c.b16 %v936, %v928
    %v1377 = vpack.c.b16 %v937, %v929
    %v1378 = vpack.c.b16 %v938, %v930
    %v1379 = vpack.c.b16 %v939, %v931
    %v1380 = vpack.c.b16 %v940, %v932
    %v1381 = vpack.c.b16 %v941, %v933
    %v1382 = vpack.c.b16 %v942, %v934
    %v1383 = vpack.c.b16 %v943, %v935
    %v1384 = vpack.c.b16 %v952, %v944
    %v1385 = vpack.c.b16 %v953, %v945
    %v1386 = vpack.c.b16 %v954, %v946
    %v1387 = vpack.c.b16 %v955, %v947
    %v1388 = vpack.c.b16 %v956, %v948
    %v1389 = vpack.c.b16 %v957, %v949
    %v1390 = vpack.c.b16 %v958, %v950
    %v1391 = vpack.c.b16 %v959, %v951
    %v1392 = vpack.c.b16 %v968, %v960
    %v1393 = vpack.c.b16 %v969, %v961
    %v1394 = vpack.c.b16 %v970, %v962
    %v1395 = vpack.c.b16 %v971, %v963
    %v1396 = vpack.c.b16 %v972, %v964
    %v1397 = vpack.c.b16 %v973, %v965
    %v1398 = vpack.c.b16 %v974, %v966
    %v1399 = vpack.c.b16 %v975, %v967
    %v1400 = vpack.c.b16 %v984, %v976
    %v1401 = vpack.c.b16 %v985, %v977
    %v1402 = vpack.c.b16 %v986, %v978
    %v1403 = vpack.c.b16 %v987, %v979
    %v1404 = vpack.c.b16 %v988, %v980
    %v1405 = vpack.c.b16 %v989, %v981
    %v1406 = vpack.c.b16 %v990, %v982
    %v1407 = vpack.c.b16 %v991, %v983
    %v1408 = vpack.c.b16 %v1000, %v992
    %v1409 = vpack.c.b16 %v1001, %v993
    %v1410 = vpack.c.b16 %v1002, %v994
    %v1411 = vpack.c.b16 %v1003, %v995
    %v1412 = vpack.c.b16 %v1004, %v996
    %v1413 = vpack.c.b16 %v1005, %v997
    %v1414 = vpack.c.b16 %v1006, %v998
    %v1415 = vpack.c.b16 %v1007, %v999
    %v1416 = vpack.c.b16 %v1016, %v1008
    %v1417 = vpack.c.b16 %v1017, %v1009
    %v1418 = vpack.c.b16 %v1018, %v1010
    %v1419 = vpack.c.b16 %v1019, %v1011
    %v1420 = vpack.c.b16 %v1020, %v1012
    %v1421 = vpack.c.b16 %v1021, %v1013
    %v1422 = vpack.c.b16 %v1022, %v1014
    %v1423 = vpack.c.b16 %v1023, %v1015
    %v1424 = vpack.c.b16 %v1032, %v1024
    %v1425 = vpack.c.b16 %v1033, %v1025
    %v1426 = vpack.c.b16 %v1034, %v1026
    %v1427 = vpack.c.b16 %v1035, %v1027
    %v1428 = vpack.c.b16 %v1036, %v1028
    %v1429 = vpack.c.b16 %v1037, %v1029
    %v1430 = vpack.c.b16 %v1038, %v1030
    %v1431 = vpack.c.b16 %v1039, %v1031
    %v1432 = vpack.c.b16 %v1048, %v1040
    %v1433 = vpack.c.b16 %v1049, %v1041
    %v1434 = vpack.c.b16 %v1050, %v1042
    %v1435 = vpack.c.b16 %v1051, %v1043
    %v1436 = vpack.c.b16 %v1052, %v1044
    %v1437 = vpack.c.b16 %v1053, %v1045
    %v1438 = vpack.c.b16 %v1054, %v1046
    %v1439 = vpack.c.b16 %v1055, %v1047
    %v1440 = vpack.c.b16 %v1064, %v1056
    %v1441 = vpack.c.b16 %v1065, %v1057
    %v1442 = vpack.c.b16 %v1066, %v1058
    %v1443 = vpack.c.b16 %v1067, %v1059
    %v1444 = vpack.c.b16 %v1068, %v1060
    %v1445 = vpack.c.b16 %v1069, %v1061
    %v1446 = vpack.c.b16 %v1070, %v1062
    %v1447 = vpack.c.b16 %v1071, %v1063
    %v1448 = vpack.c.b16 %v1080, %v1072
    %v1449 = vpack.c.b16 %v1081, %v1073
    %v1450 = vpack.c.b16 %v1082, %v1074
    %v1451 = vpack.c.b16 %v1083, %v1075
    %v1452 = vpack.c.b16 %v1084, %v1076
    %v1453 = vpack.c.b16 %v1085, %v1077
    %v1454 = vpack.c.b16 %v1086, %v1078
    %v1455 = vpack.c.b16 %v1087, %v1079
    %v1456 = vpack.c.b16 %v1096, %v1088
    %v1457 = vpack.c.b16 %v1097, %v1089
    %v1458 = vpack.c.b16 %v1098, %v1090
    %v1459 = vpack.c.b16 %v1099, %v1091
    %v1460 = vpack.c.b16 %v1100, %v1092
    %v1461 = vpack.c.b16 %v1101, %v1093
    %v1462 = vpack.c.b16 %v1102, %v1094
    %v1463 = vpack.c.b16 %v1103, %v1095
    %v1464 = vpack.c.b16 %v1112, %v1104
    %v1465 = vpack.c.b16 %v1113, %v1105
    %v1466 = vpack.c.b16 %v1114, %v1106
    %v1467 = vpack.c.b16 %v1115, %v1107
    %v1468 = vpack.c.b16 %v1116, %v1108
    %v1469 = vpack.c.b16 %v1117, %v1109
    %v1470 = vpack.c.b16 %v1118, %v1110
    %v1471 = vpack.c.b16 %v1119, %v1111
    %v1472 = vpack.c.b16 %v1128, %v1120
    %v1473 = vpack.c.b16 %v1129, %v1121
    %v1474 = vpack.c.b16 %v1130, %v1122
    %v1475 = vpack.c.b16 %v1131, %v1123
    %v1476 = vpack.c.b16 %v1132, %v1124
    %v1477 = vpack.c.b16 %v1133, %v1125
    %v1478 = vpack.c.b16 %v1134, %v1126
    %v1479 = vpack.c.b16 %v1135, %v1127
    %v1480 = vpack.c.b16 %v1144, %v1136
    %v1481 = vpack.c.b16 %v1145, %v1137
    %v1482 = vpack.c.b16 %v1146, %v1138
    %v1483 = vpack.c.b16 %v1147, %v1139
    %v1484 = vpack.c.b16 %v1148, %v1140
    %v1485 = vpack.c.b16 %v1149, %v1141
    %v1486 = vpack.c.b16 %v1150, %v1142
    %v1487 = vpack.c.b16 %v1151, %v1143
    %v1488 = vpack.c.b16 %v1160, %v1152
    %v1489 = vpack.c.b16 %v1161, %v1153
    %v1490 = vpack.c.b16 %v1162, %v1154
    %v1491 = vpack.c.b16 %v1163, %v1155
    %v1492 = vpack.c.b16 %v1164, %v1156
    %v1493 = vpack.c.b16 %v1165, %v1157
    %v1494 = vpack.c.b16 %v1166, %v1158
    %v1495 = vpack.c.b16 %v1167, %v1159
    %v1496 = vpack.c.b16 %v1176, %v1168
    %v1497 = vpack.c.b16 %v1177, %v1169
    %v1498 = vpack.c.b16 %v1178, %v1170
    %v1499 = vpack.c.b16 %v1179, %v1171
    %v1500 = vpack.c.b16 %v1180, %v1172
    %v1501 = vpack.c.b16 %v1181, %v1173
    %v1502 = vpack.c.b16 %v1182, %v1174
    %v1503 = vpack.c.b16 %v1183, %v1175
    %v1504 = vpack.c.b16 %v1192, %v1184
    %v1505 = vpack.c.b16 %v1193, %v1185
    %v1506 = vpack.c.b16 %v1194, %v1186
    %v1507 = vpack.c.b16 %v1195, %v1187
    %v1508 = vpack.c.b16 %v1196, %v1188
    %v1509 = vpack.c.b16 %v1197, %v1189
    %v1510 = vpack.c.b16 %v1198, %v1190
    %v1511 = vpack.c.b16 %v1199, %v1191
    %v1512 = vpack.c.b16 %v1208, %v1200
    %v1513 = vpack.c.b16 %v1209, %v1201
    %v1514 = vpack.c.b16 %v1210, %v1202
    %v1515 = vpack.c.b16 %v1211, %v1203
    %v1516 = vpack.c.b16 %v1212, %v1204
    %v1517 = vpack.c.b16 %v1213, %v1205
    %v1518 = vpack.c.b16 %v1214, %v1206
    %v1519 = vpack.c.b16 %v1215, %v1207
    %v1520 = vpack.c.b16 %v1224, %v1216
    %v1521 = vpack.c.b16 %v1225, %v1217
    %v1522 = vpack.c.b16 %v1226, %v1218
    %v1523 = vpack.c.b16 %v1227, %v1219
    %v1524 = vpack.c.b16 %v1228, %v1220
    %v1525 = vpack.c.b16 %v1229, %v1221
    %v1526 = vpack.c.b16 %v1230, %v1222
    %v1527 = vpack.c.b16 %v1231, %v1223
    %v1528 = vpack.c.b16 %v1240, %v1232
    %v1529 = vpack.c.b16 %v1241, %v1233
    %v1530 = vpack.c.b16 %v1242, %v1234
    %v1531 = vpack.c.b16 %v1243, %v1235
    %v1532 = vpack.c.b16 %v1244, %v1236
    %v1533 = vpack.c.b16 %v1245, %v1237
    %v1534 = vpack.c.b16 %v1246, %v1238
    %v1535 = vpack.c.b16 %v1247, %v1239
    %v1536 = vpack.c.b16 %v1256, %v1248
    %v1537 = vpack.c.b16 %v1257, %v1249
    %v1538 = vpack.c.b16 %v1258, %v1250
    %v1539 = vpack.c.b16 %v1259, %v1251
    %v1540 = vpack.c.b16 %v1260, %v1252
    %v1541 = vpack.c.b16 %v1261, %v1253
    %v1542 = vpack.c.b16 %v1262, %v1254
    %v1543 = vpack.c.b16 %v1263, %v1255
    %v1544 = vpack.c.b16 %v1272, %v1264
    %v1545 = vpack.c.b16 %v1273, %v1265
    %v1546 = vpack.c.b16 %v1274, %v1266
    %v1547 = vpack.c.b16 %v1275, %v1267
    %v1548 = vpack.c.b16 %v1276, %v1268
    %v1549 = vpack.c.b16 %v1277, %v1269
    %v1550 = vpack.c.b16 %v1278, %v1270
    %v1551 = vpack.c.b16 %v1279, %v1271
    %v1552 = vpack.c.b16 %v1288, %v1280
    %v1553 = vpack.c.b16 %v1289, %v1281
    %v1554 = vpack.c.b16 %v1290, %v1282
    %v1555 = vpack.c.b16 %v1291, %v1283
    %v1556 = vpack.c.b16 %v1292, %v1284
    %v1557 = vpack.c.b16 %v1293, %v1285
    %v1558 = vpack.c.b16 %v1294, %v1286
    %v1559 = vpack.c.b16 %v1295, %v1287
    %v1560 = vpack.c.b16 %v1304, %v1296
    %v1561 = vpack.c.b16 %v1305, %v1297
    %v1562 = vpack.c.b16 %v1306, %v1298
    %v1563 = vpack.c.b16 %v1307, %v1299
    %v1564 = vpack.c.b16 %v1308, %v1300
    %v1565 = vpack.c.b16 %v1309, %v1301
    %v1566 = vpack.c.b16 %v1310, %v1302
    %v1567 = vpack.c.b16 %v1311, %v1303
    %1824 = vmatprep.subr.bf16.mxu0 %v1313
    %1825 = vmatpush1.bf16.msra.mxu0 %v1312
    %1826 = vmatprep.subr.bf16.mxu0 %v1321
    %1827 = vmatpush1.bf16.msra.mxu0 %v1320
    %1828 = vmatprep.subr.bf16.mxu0 %v1329
    %1829 = vmatpush1.bf16.msra.mxu0 %v1328
    %1830 = vmatprep.subr.bf16.mxu0 %v1337
    %1831 = vmatpush1.bf16.msra.mxu0 %v1336
    %1832 = vmatprep.subr.bf16.mxu0 %v1345
    %1833 = vmatpush1.bf16.msra.mxu0 %v1344
    %1834 = vmatprep.subr.bf16.mxu0 %v1353
    %1835 = vmatpush1.bf16.msra.mxu0 %v1352
    %1836 = vmatprep.subr.bf16.mxu0 %v1361
    %1837 = vmatpush1.bf16.msra.mxu0 %v1360
    %1838 = vmatprep.subr.bf16.mxu0 %v1369
    %1839 = vmatpush1.bf16.msra.mxu0 %v1368
    %1840 = vmatprep.subr.bf16.mxu0 %v1377
    %1841 = vmatpush1.bf16.msra.mxu0 %v1376
    %1842 = vmatprep.subr.bf16.mxu0 %v1385
    %1843 = vmatpush1.bf16.msra.mxu0 %v1384
    %1844 = vmatprep.subr.bf16.mxu0 %v1393
    %1845 = vmatpush1.bf16.msra.mxu0 %v1392
    %1846 = vmatprep.subr.bf16.mxu0 %v1401
    %1847 = vmatpush1.bf16.msra.mxu0 %v1400
    %1848 = vmatprep.subr.bf16.mxu0 %v1409
    %1849 = vmatpush1.bf16.msra.mxu0 %v1408
    %1850 = vmatprep.subr.bf16.mxu0 %v1417
    %1851 = vmatpush1.bf16.msra.mxu0 %v1416
    %1852 = vmatprep.subr.bf16.mxu0 %v1425
    %1853 = vmatpush1.bf16.msra.mxu0 %v1424
    %1854 = vmatprep.subr.bf16.mxu0 %v1433
    %1855 = vmatpush1.bf16.msra.mxu0 %v1432
    %1856 = vmatprep.mubr.bf16.mxu0 %v481
    %1857 = vmatmul.mubr.bf16.gmra.mrb[0].mxu0 %v480
    %v1858 = vpop.f32.mrb[0].mxu0
    %v1859 = vadd.f32 %v347, %v1858
    %v1860 = vpop.f32.mrb[0].mxu0
    %v1861 = vadd.f32 %v351, %v1860
    %v1862 = vpop.f32.mrb[0].mxu0
    %v1863 = vadd.f32 %v347, %v1862
    %v1864 = vpop.f32.mrb[0].mxu0
    %v1865 = vadd.f32 %v351, %v1864
    %1866 = vmatprep.mubr.bf16.mxu0 %v485
    %1867 = vmatmul.mubr.bf16.gmra.mrb[0].mxu0 %v484
    %v1868 = vpop.f32.mrb[0].mxu0
    %v1869 = vadd.f32 %v347, %v1868
    %v1870 = vpop.f32.mrb[0].mxu0
    %v1871 = vadd.f32 %v351, %v1870
    %v1872 = vpop.f32.mrb[0].mxu0
    %v1873 = vadd.f32 %v347, %v1872
    %v1874 = vpop.f32.mrb[0].mxu0
    %v1875 = vadd.f32 %v351, %v1874
    %1876 = vmatprep.mubr.bf16.mxu0 %v489
    %1877 = vmatmul.mubr.bf16.gmra.mrb[0].mxu0 %v488
    %v1878 = vpop.f32.mrb[0].mxu0
    %v1879 = vadd.f32 %v347, %v1878
    %v1880 = vpop.f32.mrb[0].mxu0
    %v1881 = vadd.f32 %v351, %v1880
    %v1882 = vpop.f32.mrb[0].mxu0
    %v1883 = vadd.f32 %v347, %v1882
    %v1884 = vpop.f32.mrb[0].mxu0
    %v1885 = vadd.f32 %v351, %v1884
    %1886 = vmatprep.mubr.bf16.mxu0 %v493
    %1887 = vmatmul.mubr.bf16.gmra.mrb[0].mxu0 %v492
    %v1888 = vpop.f32.mrb[0].mxu0
    %v1889 = vadd.f32 %v347, %v1888
    %v1890 = vpop.f32.mrb[0].mxu0
    %v1891 = vadd.f32 %v351, %v1890
    %v1892 = vpop.f32.mrb[0].mxu0
    %v1893 = vadd.f32 %v347, %v1892
    %v1894 = vpop.f32.mrb[0].mxu0
    %v1895 = vadd.f32 %v351, %v1894
    %1896 = vmatprep.mubr.bf16.mxu0 %v497
    %1897 = vmatmul.mubr.bf16.gmra.mrb[0].mxu0 %v496
    %v1898 = vpop.f32.mrb[0].mxu0
    %v1899 = vadd.f32 %v347, %v1898
    %v1900 = vpop.f32.mrb[0].mxu0
    %v1901 = vadd.f32 %v351, %v1900
    %v1902 = vpop.f32.mrb[0].mxu0
    %v1903 = vadd.f32 %v347, %v1902
    %v1904 = vpop.f32.mrb[0].mxu0
    %v1905 = vadd.f32 %v351, %v1904
    %1906 = vmatprep.mubr.bf16.mxu0 %v501
    %1907 = vmatmul.mubr.bf16.gmra.mrb[0].mxu0 %v500
    %v1908 = vpop.f32.mrb[0].mxu0
    %v1909 = vadd.f32 %v347, %v1908
    %v1910 = vpop.f32.mrb[0].mxu0
    %v1911 = vadd.f32 %v351, %v1910
    %v1912 = vpop.f32.mrb[0].mxu0
    %v1913 = vadd.f32 %v347, %v1912
    %v1914 = vpop.f32.mrb[0].mxu0
    %v1915 = vadd.f32 %v351, %v1914
    %1916 = vmatprep.mubr.bf16.mxu0 %v505
    %1917 = vmatmul.mubr.bf16.gmra.mrb[0].mxu0 %v504
    %v1918 = vpop.f32.mrb[0].mxu0
    %v1919 = vadd.f32 %v347, %v1918
    %v1920 = vpop.f32.mrb[0].mxu0
    %v1921 = vadd.f32 %v351, %v1920
    %v1922 = vpop.f32.mrb[0].mxu0
    %v1923 = vadd.f32 %v347, %v1922
    %v1924 = vpop.f32.mrb[0].mxu0
    %v1925 = vadd.f32 %v351, %v1924
    %1926 = vmatprep.mubr.bf16.mxu0 %v509
    %1927 = vmatmul.mubr.bf16.gmra.mrb[0].mxu0 %v508
    %v1928 = vpop.f32.mrb[0].mxu0
    %v1929 = vadd.f32 %v347, %v1928
    %v1930 = vpop.f32.mrb[0].mxu0
    %v1931 = vadd.f32 %v351, %v1930
    %v1932 = vpop.f32.mrb[0].mxu0
    %v1933 = vadd.f32 %v347, %v1932
    %v1934 = vpop.f32.mrb[0].mxu0
    %v1935 = vadd.f32 %v351, %v1934
    %1936 = vdwg.mxu0
    %1937 = vmatprep.subr.bf16.mxu0 %v1441
    %1938 = vmatpush1.bf16.msra.mxu0 %v1440
    %1939 = vmatprep.subr.bf16.mxu0 %v1449
    %1940 = vmatpush1.bf16.msra.mxu0 %v1448
    %1941 = vmatprep.subr.bf16.mxu0 %v1457
    %1942 = vmatpush1.bf16.msra.mxu0 %v1456
    %1943 = vmatprep.subr.bf16.mxu0 %v1465
    %1944 = vmatpush1.bf16.msra.mxu0 %v1464
    %1945 = vmatprep.subr.bf16.mxu0 %v1473
    %1946 = vmatpush1.bf16.msra.mxu0 %v1472
    %1947 = vmatprep.subr.bf16.mxu0 %v1481
    %1948 = vmatpush1.bf16.msra.mxu0 %v1480
    %1949 = vmatprep.subr.bf16.mxu0 %v1489
    %1950 = vmatpush1.bf16.msra.mxu0 %v1488
    %1951 = vmatprep.subr.bf16.mxu0 %v1497
    %1952 = vmatpush1.bf16.msra.mxu0 %v1496
    %1953 = vmatprep.subr.bf16.mxu0 %v1505
    %1954 = vmatpush1.bf16.msra.mxu0 %v1504
    %1955 = vmatprep.subr.bf16.mxu0 %v1513
    %1956 = vmatpush1.bf16.msra.mxu0 %v1512
    %1957 = vmatprep.subr.bf16.mxu0 %v1521
    %1958 = vmatpush1.bf16.msra.mxu0 %v1520
    %1959 = vmatprep.subr.bf16.mxu0 %v1529
    %1960 = vmatpush1.bf16.msra.mxu0 %v1528
    %1961 = vmatprep.subr.bf16.mxu0 %v1537
    %1962 = vmatpush1.bf16.msra.mxu0 %v1536
    %1963 = vmatprep.subr.bf16.mxu0 %v1545
    %1964 = vmatpush1.bf16.msra.mxu0 %v1544
    %1965 = vmatprep.subr.bf16.mxu0 %v1553
    %1966 = vmatpush1.bf16.msra.mxu0 %v1552
    %1967 = vmatprep.subr.bf16.mxu0 %v1561
    %1968 = vmatpush1.bf16.msra.mxu0 %v1560
    %1969 = vmatprep.mubr.bf16.mxu0 %v483
    %1970 = vmatmul.mubr.bf16.gmra.mrb[0].mxu0 %v482
    %v1971 = vpop.f32.mrb[0].mxu0
    %v1972 = vadd.f32 %v1859, %v1971
    %v1973 = vpop.f32.mrb[0].mxu0
    %v1974 = vadd.f32 %v1861, %v1973
    %v1975 = vpop.f32.mrb[0].mxu0
    %v1976 = vadd.f32 %v1863, %v1975
    %v1977 = vpop.f32.mrb[0].mxu0
    %v1978 = vadd.f32 %v1865, %v1977
    %1979 = vmatprep.mubr.bf16.mxu0 %v487
    %1980 = vmatmul.mubr.bf16.gmra.mrb[0].mxu0 %v486
    %v1981 = vpop.f32.mrb[0].mxu0
    %v1982 = vadd.f32 %v1869, %v1981
    %v1983 = vpop.f32.mrb[0].mxu0
    %v1984 = vadd.f32 %v1871, %v1983
    %v1985 = vpop.f32.mrb[0].mxu0
    %v1986 = vadd.f32 %v1873, %v1985
    %v1987 = vpop.f32.mrb[0].mxu0
    %v1988 = vadd.f32 %v1875, %v1987
    %1989 = vmatprep.mubr.bf16.mxu0 %v491
    %1990 = vmatmul.mubr.bf16.gmra.mrb[0].mxu0 %v490
    %v1991 = vpop.f32.mrb[0].mxu0
    %v1992 = vadd.f32 %v1879, %v1991
    %v1993 = vpop.f32.mrb[0].mxu0
    %v1994 = vadd.f32 %v1881, %v1993
    %v1995 = vpop.f32.mrb[0].mxu0
    %v1996 = vadd.f32 %v1883, %v1995
    %v1997 = vpop.f32.mrb[0].mxu0
    %v1998 = vadd.f32 %v1885, %v1997
    %1999 = vmatprep.mubr.bf16.mxu0 %v495
    %2000 = vmatmul.mubr.bf16.gmra.mrb[0].mxu0 %v494
    %v2001 = vpop.f32.mrb[0].mxu0
    %v2002 = vadd.f32 %v1889, %v2001
    %v2003 = vpop.f32.mrb[0].mxu0
    %v2004 = vadd.f32 %v1891, %v2003
    %v2005 = vpop.f32.mrb[0].mxu0
    %v2006 = vadd.f32 %v1893, %v2005
    %v2007 = vpop.f32.mrb[0].mxu0
    %v2008 = vadd.f32 %v1895, %v2007
    %2009 = vmatprep.mubr.bf16.mxu0 %v499
    %2010 = vmatmul.mubr.bf16.gmra.mrb[0].mxu0 %v498
    %v2011 = vpop.f32.mrb[0].mxu0
    %v2012 = vadd.f32 %v1899, %v2011
    %v2013 = vpop.f32.mrb[0].mxu0
    %v2014 = vadd.f32 %v1901, %v2013
    %v2015 = vpop.f32.mrb[0].mxu0
    %v2016 = vadd.f32 %v1903, %v2015
    %v2017 = vpop.f32.mrb[0].mxu0
    %v2018 = vadd.f32 %v1905, %v2017
    %2019 = vmatprep.mubr.bf16.mxu0 %v503
    %2020 = vmatmul.mubr.bf16.gmra.mrb[0].mxu0 %v502
    %v2021 = vpop.f32.mrb[0].mxu0
    %v2022 = vadd.f32 %v1909, %v2021
    %v2023 = vpop.f32.mrb[0].mxu0
    %v2024 = vadd.f32 %v1911, %v2023
    %v2025 = vpop.f32.mrb[0].mxu0
    %v2026 = vadd.f32 %v1913, %v2025
    %v2027 = vpop.f32.mrb[0].mxu0
    %v2028 = vadd.f32 %v1915, %v2027
    %2029 = vmatprep.mubr.bf16.mxu0 %v507
    %2030 = vmatmul.mubr.bf16.gmra.mrb[0].mxu0 %v506
    %v2031 = vpop.f32.mrb[0].mxu0
    %v2032 = vadd.f32 %v1919, %v2031
    %v2033 = vpop.f32.mrb[0].mxu0
    %v2034 = vadd.f32 %v1921, %v2033
    %v2035 = vpop.f32.mrb[0].mxu0
    %v2036 = vadd.f32 %v1923, %v2035
    %v2037 = vpop.f32.mrb[0].mxu0
    %v2038 = vadd.f32 %v1925, %v2037
    %2039 = vmatprep.mubr.bf16.mxu0 %v511
    %2040 = vmatmul.mubr.bf16.gmra.mrb[0].mxu0 %v510
    %v2041 = vpop.f32.mrb[0].mxu0
    %v2042 = vadd.f32 %v1929, %v2041
    %v2043 = vpop.f32.mrb[0].mxu0
    %v2044 = vadd.f32 %v1931, %v2043
    %v2045 = vpop.f32.mrb[0].mxu0
    %v2046 = vadd.f32 %v1933, %v2045
    %v2047 = vpop.f32.mrb[0].mxu0
    %v2048 = vadd.f32 %v1935, %v2047
    %2049 = vdwg.mxu0
    %2050 = vmatprep.subr.bf16.mxu0 %v1315
    %2051 = vmatpush1.bf16.msra.mxu0 %v1314
    %2052 = vmatprep.subr.bf16.mxu0 %v1323
    %2053 = vmatpush1.bf16.msra.mxu0 %v1322
    %2054 = vmatprep.subr.bf16.mxu0 %v1331
    %2055 = vmatpush1.bf16.msra.mxu0 %v1330
    %2056 = vmatprep.subr.bf16.mxu0 %v1339
    %2057 = vmatpush1.bf16.msra.mxu0 %v1338
    %2058 = vmatprep.subr.bf16.mxu0 %v1347
    %2059 = vmatpush1.bf16.msra.mxu0 %v1346
    %2060 = vmatprep.subr.bf16.mxu0 %v1355
    %2061 = vmatpush1.bf16.msra.mxu0 %v1354
    %2062 = vmatprep.subr.bf16.mxu0 %v1363
    %2063 = vmatpush1.bf16.msra.mxu0 %v1362
    %2064 = vmatprep.subr.bf16.mxu0 %v1371
    %2065 = vmatpush1.bf16.msra.mxu0 %v1370
    %2066 = vmatprep.subr.bf16.mxu0 %v1379
    %2067 = vmatpush1.bf16.msra.mxu0 %v1378
    %2068 = vmatprep.subr.bf16.mxu0 %v1387
    %2069 = vmatpush1.bf16.msra.mxu0 %v1386
    %2070 = vmatprep.subr.bf16.mxu0 %v1395
    %2071 = vmatpush1.bf16.msra.mxu0 %v1394
    %2072 = vmatprep.subr.bf16.mxu0 %v1403
    %2073 = vmatpush1.bf16.msra.mxu0 %v1402
    %2074 = vmatprep.subr.bf16.mxu0 %v1411
    %2075 = vmatpush1.bf16.msra.mxu0 %v1410
    %2076 = vmatprep.subr.bf16.mxu0 %v1419
    %2077 = vmatpush1.bf16.msra.mxu0 %v1418
    %2078 = vmatprep.subr.bf16.mxu0 %v1427
    %2079 = vmatpush1.bf16.msra.mxu0 %v1426
    %2080 = vmatprep.subr.bf16.mxu0 %v1435
    %2081 = vmatpush1.bf16.msra.mxu0 %v1434
    %2082 = vmatprep.mubr.bf16.mxu0 %v481
    %2083 = vmatmul.mubr.bf16.gmra.mrb[0].mxu0 %v480
    %v2084 = vpop.f32.mrb[0].mxu0
    %v2085 = vadd.f32 %v355, %v2084
    %v2086 = vpop.f32.mrb[0].mxu0
    %v2087 = vadd.f32 %v359, %v2086
    %v2088 = vpop.f32.mrb[0].mxu0
    %v2089 = vadd.f32 %v355, %v2088
    %v2090 = vpop.f32.mrb[0].mxu0
    %v2091 = vadd.f32 %v359, %v2090
    %2092 = vmatprep.mubr.bf16.mxu0 %v485
    %2093 = vmatmul.mubr.bf16.gmra.mrb[0].mxu0 %v484
    %v2094 = vpop.f32.mrb[0].mxu0
    %v2095 = vadd.f32 %v355, %v2094
    %v2096 = vpop.f32.mrb[0].mxu0
    %v2097 = vadd.f32 %v359, %v2096
    %v2098 = vpop.f32.mrb[0].mxu0
    %v2099 = vadd.f32 %v355, %v2098
    %v2100 = vpop.f32.mrb[0].mxu0
    %v2101 = vadd.f32 %v359, %v2100
    %2102 = vmatprep.mubr.bf16.mxu0 %v489
    %2103 = vmatmul.mubr.bf16.gmra.mrb[0].mxu0 %v488
    %v2104 = vpop.f32.mrb[0].mxu0
    %v2105 = vadd.f32 %v355, %v2104
    %v2106 = vpop.f32.mrb[0].mxu0
    %v2107 = vadd.f32 %v359, %v2106
    %v2108 = vpop.f32.mrb[0].mxu0
    %v2109 = vadd.f32 %v355, %v2108
    %v2110 = vpop.f32.mrb[0].mxu0
    %v2111 = vadd.f32 %v359, %v2110
    %2112 = vmatprep.mubr.bf16.mxu0 %v493
    %2113 = vmatmul.mubr.bf16.gmra.mrb[0].mxu0 %v492
    %v2114 = vpop.f32.mrb[0].mxu0
    %v2115 = vadd.f32 %v355, %v2114
    %v2116 = vpop.f32.mrb[0].mxu0
    %v2117 = vadd.f32 %v359, %v2116
    %v2118 = vpop.f32.mrb[0].mxu0
    %v2119 = vadd.f32 %v355, %v2118
    %v2120 = vpop.f32.mrb[0].mxu0
    %v2121 = vadd.f32 %v359, %v2120
    %2122 = vmatprep.mubr.bf16.mxu0 %v497
    %2123 = vmatmul.mubr.bf16.gmra.mrb[0].mxu0 %v496
    %v2124 = vpop.f32.mrb[0].mxu0
    %v2125 = vadd.f32 %v355, %v2124
    %v2126 = vpop.f32.mrb[0].mxu0
    %v2127 = vadd.f32 %v359, %v2126
    %v2128 = vpop.f32.mrb[0].mxu0
    %v2129 = vadd.f32 %v355, %v2128
    %v2130 = vpop.f32.mrb[0].mxu0
    %v2131 = vadd.f32 %v359, %v2130
    %2132 = vmatprep.mubr.bf16.mxu0 %v501
    %2133 = vmatmul.mubr.bf16.gmra.mrb[0].mxu0 %v500
    %v2134 = vpop.f32.mrb[0].mxu0
    %v2135 = vadd.f32 %v355, %v2134
    %v2136 = vpop.f32.mrb[0].mxu0
    %v2137 = vadd.f32 %v359, %v2136
    %v2138 = vpop.f32.mrb[0].mxu0
    %v2139 = vadd.f32 %v355, %v2138
    %v2140 = vpop.f32.mrb[0].mxu0
    %v2141 = vadd.f32 %v359, %v2140
    %2142 = vmatprep.mubr.bf16.mxu0 %v505
    %2143 = vmatmul.mubr.bf16.gmra.mrb[0].mxu0 %v504
    %v2144 = vpop.f32.mrb[0].mxu0
    %v2145 = vadd.f32 %v355, %v2144
    %v2146 = vpop.f32.mrb[0].mxu0
    %v2147 = vadd.f32 %v359, %v2146
    %v2148 = vpop.f32.mrb[0].mxu0
    %v2149 = vadd.f32 %v355, %v2148
    %v2150 = vpop.f32.mrb[0].mxu0
    %v2151 = vadd.f32 %v359, %v2150
    %2152 = vmatprep.mubr.bf16.mxu0 %v509
    %2153 = vmatmul.mubr.bf16.gmra.mrb[0].mxu0 %v508
    %v2154 = vpop.f32.mrb[0].mxu0
    %v2155 = vadd.f32 %v355, %v2154
    %v2156 = vpop.f32.mrb[0].mxu0
    %v2157 = vadd.f32 %v359, %v2156
    %v2158 = vpop.f32.mrb[0].mxu0
    %v2159 = vadd.f32 %v355, %v2158
    %v2160 = vpop.f32.mrb[0].mxu0
    %v2161 = vadd.f32 %v359, %v2160
    %2162 = vdwg.mxu0
    %2163 = vmatprep.subr.bf16.mxu0 %v1443
    %2164 = vmatpush1.bf16.msra.mxu0 %v1442
    %2165 = vmatprep.subr.bf16.mxu0 %v1451
    %2166 = vmatpush1.bf16.msra.mxu0 %v1450
    %2167 = vmatprep.subr.bf16.mxu0 %v1459
    %2168 = vmatpush1.bf16.msra.mxu0 %v1458
    %2169 = vmatprep.subr.bf16.mxu0 %v1467
    %2170 = vmatpush1.bf16.msra.mxu0 %v1466
    %2171 = vmatprep.subr.bf16.mxu0 %v1475
    %2172 = vmatpush1.bf16.msra.mxu0 %v1474
    %2173 = vmatprep.subr.bf16.mxu0 %v1483
    %2174 = vmatpush1.bf16.msra.mxu0 %v1482
    %2175 = vmatprep.subr.bf16.mxu0 %v1491
    %2176 = vmatpush1.bf16.msra.mxu0 %v1490
    %2177 = vmatprep.subr.bf16.mxu0 %v1499
    %2178 = vmatpush1.bf16.msra.mxu0 %v1498
    %2179 = vmatprep.subr.bf16.mxu0 %v1507
    %2180 = vmatpush1.bf16.msra.mxu0 %v1506
    %2181 = vmatprep.subr.bf16.mxu0 %v1515
    %2182 = vmatpush1.bf16.msra.mxu0 %v1514
    %2183 = vmatprep.subr.bf16.mxu0 %v1523
    %2184 = vmatpush1.bf16.msra.mxu0 %v1522
    %2185 = vmatprep.subr.bf16.mxu0 %v1531
    %2186 = vmatpush1.bf16.msra.mxu0 %v1530
    %2187 = vmatprep.subr.bf16.mxu0 %v1539
    %2188 = vmatpush1.bf16.msra.mxu0 %v1538
    %2189 = vmatprep.subr.bf16.mxu0 %v1547
    %2190 = vmatpush1.bf16.msra.mxu0 %v1546
    %2191 = vmatprep.subr.bf16.mxu0 %v1555
    %2192 = vmatpush1.bf16.msra.mxu0 %v1554
    %2193 = vmatprep.subr.bf16.mxu0 %v1563
    %2194 = vmatpush1.bf16.msra.mxu0 %v1562
    %2195 = vmatprep.mubr.bf16.mxu0 %v483
    %2196 = vmatmul.mubr.bf16.gmra.mrb[0].mxu0 %v482
    %v2197 = vpop.f32.mrb[0].mxu0
    %v2198 = vadd.f32 %v2085, %v2197
    %v2199 = vpop.f32.mrb[0].mxu0
    %v2200 = vadd.f32 %v2087, %v2199
    %v2201 = vpop.f32.mrb[0].mxu0
    %v2202 = vadd.f32 %v2089, %v2201
    %v2203 = vpop.f32.mrb[0].mxu0
    %v2204 = vadd.f32 %v2091, %v2203
    %2205 = vmatprep.mubr.bf16.mxu0 %v487
    %2206 = vmatmul.mubr.bf16.gmra.mrb[0].mxu0 %v486
    %v2207 = vpop.f32.mrb[0].mxu0
    %v2208 = vadd.f32 %v2095, %v2207
    %v2209 = vpop.f32.mrb[0].mxu0
    %v2210 = vadd.f32 %v2097, %v2209
    %v2211 = vpop.f32.mrb[0].mxu0
    %v2212 = vadd.f32 %v2099, %v2211
    %v2213 = vpop.f32.mrb[0].mxu0
    %v2214 = vadd.f32 %v2101, %v2213
    %2215 = vmatprep.mubr.bf16.mxu0 %v491
    %2216 = vmatmul.mubr.bf16.gmra.mrb[0].mxu0 %v490
    %v2217 = vpop.f32.mrb[0].mxu0
    %v2218 = vadd.f32 %v2105, %v2217
    %v2219 = vpop.f32.mrb[0].mxu0
    %v2220 = vadd.f32 %v2107, %v2219
    %v2221 = vpop.f32.mrb[0].mxu0
    %v2222 = vadd.f32 %v2109, %v2221
    %v2223 = vpop.f32.mrb[0].mxu0
    %v2224 = vadd.f32 %v2111, %v2223
    %2225 = vmatprep.mubr.bf16.mxu0 %v495
    %2226 = vmatmul.mubr.bf16.gmra.mrb[0].mxu0 %v494
    %v2227 = vpop.f32.mrb[0].mxu0
    %v2228 = vadd.f32 %v2115, %v2227
    %v2229 = vpop.f32.mrb[0].mxu0
    %v2230 = vadd.f32 %v2117, %v2229
    %v2231 = vpop.f32.mrb[0].mxu0
    %v2232 = vadd.f32 %v2119, %v2231
    %v2233 = vpop.f32.mrb[0].mxu0
    %v2234 = vadd.f32 %v2121, %v2233
    %2235 = vmatprep.mubr.bf16.mxu0 %v499
    %2236 = vmatmul.mubr.bf16.gmra.mrb[0].mxu0 %v498
    %v2237 = vpop.f32.mrb[0].mxu0
    %v2238 = vadd.f32 %v2125, %v2237
    %v2239 = vpop.f32.mrb[0].mxu0
    %v2240 = vadd.f32 %v2127, %v2239
    %v2241 = vpop.f32.mrb[0].mxu0
    %v2242 = vadd.f32 %v2129, %v2241
    %v2243 = vpop.f32.mrb[0].mxu0
    %v2244 = vadd.f32 %v2131, %v2243
    %2245 = vmatprep.mubr.bf16.mxu0 %v503
    %2246 = vmatmul.mubr.bf16.gmra.mrb[0].mxu0 %v502
    %v2247 = vpop.f32.mrb[0].mxu0
    %v2248 = vadd.f32 %v2135, %v2247
    %v2249 = vpop.f32.mrb[0].mxu0
    %v2250 = vadd.f32 %v2137, %v2249
    %v2251 = vpop.f32.mrb[0].mxu0
    %v2252 = vadd.f32 %v2139, %v2251
    %v2253 = vpop.f32.mrb[0].mxu0
    %v2254 = vadd.f32 %v2141, %v2253
    %2255 = vmatprep.mubr.bf16.mxu0 %v507
    %2256 = vmatmul.mubr.bf16.gmra.mrb[0].mxu0 %v506
    %v2257 = vpop.f32.mrb[0].mxu0
    %v2258 = vadd.f32 %v2145, %v2257
    %v2259 = vpop.f32.mrb[0].mxu0
    %v2260 = vadd.f32 %v2147, %v2259
    %v2261 = vpop.f32.mrb[0].mxu0
    %v2262 = vadd.f32 %v2149, %v2261
    %v2263 = vpop.f32.mrb[0].mxu0
    %v2264 = vadd.f32 %v2151, %v2263
    %2265 = vmatprep.mubr.bf16.mxu0 %v511
    %2266 = vmatmul.mubr.bf16.gmra.mrb[0].mxu0 %v510
    %v2267 = vpop.f32.mrb[0].mxu0
    %v2268 = vadd.f32 %v2155, %v2267
    %v2269 = vpop.f32.mrb[0].mxu0
    %v2270 = vadd.f32 %v2157, %v2269
    %v2271 = vpop.f32.mrb[0].mxu0
    %v2272 = vadd.f32 %v2159, %v2271
    %v2273 = vpop.f32.mrb[0].mxu0
    %v2274 = vadd.f32 %v2161, %v2273
    %2275 = vdwg.mxu0
    %2276 = vmatprep.subr.bf16.mxu0 %v1317
    %2277 = vmatpush1.bf16.msra.mxu0 %v1316
    %2278 = vmatprep.subr.bf16.mxu0 %v1325
    %2279 = vmatpush1.bf16.msra.mxu0 %v1324
    %2280 = vmatprep.subr.bf16.mxu0 %v1333
    %2281 = vmatpush1.bf16.msra.mxu0 %v1332
    %2282 = vmatprep.subr.bf16.mxu0 %v1341
    %2283 = vmatpush1.bf16.msra.mxu0 %v1340
    %2284 = vmatprep.subr.bf16.mxu0 %v1349
    %2285 = vmatpush1.bf16.msra.mxu0 %v1348
    %2286 = vmatprep.subr.bf16.mxu0 %v1357
    %2287 = vmatpush1.bf16.msra.mxu0 %v1356
    %2288 = vmatprep.subr.bf16.mxu0 %v1365
    %2289 = vmatpush1.bf16.msra.mxu0 %v1364
    %2290 = vmatprep.subr.bf16.mxu0 %v1373
    %2291 = vmatpush1.bf16.msra.mxu0 %v1372
    %2292 = vmatprep.subr.bf16.mxu0 %v1381
    %2293 = vmatpush1.bf16.msra.mxu0 %v1380
    %2294 = vmatprep.subr.bf16.mxu0 %v1389
    %2295 = vmatpush1.bf16.msra.mxu0 %v1388
    %2296 = vmatprep.subr.bf16.mxu0 %v1397
    %2297 = vmatpush1.bf16.msra.mxu0 %v1396
    %2298 = vmatprep.subr.bf16.mxu0 %v1405
    %2299 = vmatpush1.bf16.msra.mxu0 %v1404
    %2300 = vmatprep.subr.bf16.mxu0 %v1413
    %2301 = vmatpush1.bf16.msra.mxu0 %v1412
    %2302 = vmatprep.subr.bf16.mxu0 %v1421
    %2303 = vmatpush1.bf16.msra.mxu0 %v1420
    %2304 = vmatprep.subr.bf16.mxu0 %v1429
    %2305 = vmatpush1.bf16.msra.mxu0 %v1428
    %2306 = vmatprep.subr.bf16.mxu0 %v1437
    %2307 = vmatpush1.bf16.msra.mxu0 %v1436
    %2308 = vmatprep.mubr.bf16.mxu0 %v481
    %2309 = vmatmul.mubr.bf16.gmra.mrb[0].mxu0 %v480
    %v2310 = vpop.f32.mrb[0].mxu0
    %v2311 = vadd.f32 %v363, %v2310
    %v2312 = vpop.f32.mrb[0].mxu0
    %v2313 = vadd.f32 %v367, %v2312
    %v2314 = vpop.f32.mrb[0].mxu0
    %v2315 = vadd.f32 %v363, %v2314
    %v2316 = vpop.f32.mrb[0].mxu0
    %v2317 = vadd.f32 %v367, %v2316
    %2318 = vmatprep.mubr.bf16.mxu0 %v485
    %2319 = vmatmul.mubr.bf16.gmra.mrb[0].mxu0 %v484
    %v2320 = vpop.f32.mrb[0].mxu0
    %v2321 = vadd.f32 %v363, %v2320
    %v2322 = vpop.f32.mrb[0].mxu0
    %v2323 = vadd.f32 %v367, %v2322
    %v2324 = vpop.f32.mrb[0].mxu0
    %v2325 = vadd.f32 %v363, %v2324
    %v2326 = vpop.f32.mrb[0].mxu0
    %v2327 = vadd.f32 %v367, %v2326
    %2328 = vmatprep.mubr.bf16.mxu0 %v489
    %2329 = vmatmul.mubr.bf16.gmra.mrb[0].mxu0 %v488
    %v2330 = vpop.f32.mrb[0].mxu0
    %v2331 = vadd.f32 %v363, %v2330
    %v2332 = vpop.f32.mrb[0].mxu0
    %v2333 = vadd.f32 %v367, %v2332
    %v2334 = vpop.f32.mrb[0].mxu0
    %v2335 = vadd.f32 %v363, %v2334
    %v2336 = vpop.f32.mrb[0].mxu0
    %v2337 = vadd.f32 %v367, %v2336
    %2338 = vmatprep.mubr.bf16.mxu0 %v493
    %2339 = vmatmul.mubr.bf16.gmra.mrb[0].mxu0 %v492
    %v2340 = vpop.f32.mrb[0].mxu0
    %v2341 = vadd.f32 %v363, %v2340
    %v2342 = vpop.f32.mrb[0].mxu0
    %v2343 = vadd.f32 %v367, %v2342
    %v2344 = vpop.f32.mrb[0].mxu0
    %v2345 = vadd.f32 %v363, %v2344
    %v2346 = vpop.f32.mrb[0].mxu0
    %v2347 = vadd.f32 %v367, %v2346
    %2348 = vmatprep.mubr.bf16.mxu0 %v497
    %2349 = vmatmul.mubr.bf16.gmra.mrb[0].mxu0 %v496
    %v2350 = vpop.f32.mrb[0].mxu0
    %v2351 = vadd.f32 %v363, %v2350
    %v2352 = vpop.f32.mrb[0].mxu0
    %v2353 = vadd.f32 %v367, %v2352
    %v2354 = vpop.f32.mrb[0].mxu0
    %v2355 = vadd.f32 %v363, %v2354
    %v2356 = vpop.f32.mrb[0].mxu0
    %v2357 = vadd.f32 %v367, %v2356
    %2358 = vmatprep.mubr.bf16.mxu0 %v501
    %2359 = vmatmul.mubr.bf16.gmra.mrb[0].mxu0 %v500
    %v2360 = vpop.f32.mrb[0].mxu0
    %v2361 = vadd.f32 %v363, %v2360
    %v2362 = vpop.f32.mrb[0].mxu0
    %v2363 = vadd.f32 %v367, %v2362
    %v2364 = vpop.f32.mrb[0].mxu0
    %v2365 = vadd.f32 %v363, %v2364
    %v2366 = vpop.f32.mrb[0].mxu0
    %v2367 = vadd.f32 %v367, %v2366
    %2368 = vmatprep.mubr.bf16.mxu0 %v505
    %2369 = vmatmul.mubr.bf16.gmra.mrb[0].mxu0 %v504
    %v2370 = vpop.f32.mrb[0].mxu0
    %v2371 = vadd.f32 %v363, %v2370
    %v2372 = vpop.f32.mrb[0].mxu0
    %v2373 = vadd.f32 %v367, %v2372
    %v2374 = vpop.f32.mrb[0].mxu0
    %v2375 = vadd.f32 %v363, %v2374
    %v2376 = vpop.f32.mrb[0].mxu0
    %v2377 = vadd.f32 %v367, %v2376
    %2378 = vmatprep.mubr.bf16.mxu0 %v509
    %2379 = vmatmul.mubr.bf16.gmra.mrb[0].mxu0 %v508
    %v2380 = vpop.f32.mrb[0].mxu0
    %v2381 = vadd.f32 %v363, %v2380
    %v2382 = vpop.f32.mrb[0].mxu0
    %v2383 = vadd.f32 %v367, %v2382
    %v2384 = vpop.f32.mrb[0].mxu0
    %v2385 = vadd.f32 %v363, %v2384
    %v2386 = vpop.f32.mrb[0].mxu0
    %v2387 = vadd.f32 %v367, %v2386
    %2388 = vdwg.mxu0
    %2389 = vmatprep.subr.bf16.mxu0 %v1445
    %2390 = vmatpush1.bf16.msra.mxu0 %v1444
    %2391 = vmatprep.subr.bf16.mxu0 %v1453
    %2392 = vmatpush1.bf16.msra.mxu0 %v1452
    %2393 = vmatprep.subr.bf16.mxu0 %v1461
    %2394 = vmatpush1.bf16.msra.mxu0 %v1460
    %2395 = vmatprep.subr.bf16.mxu0 %v1469
    %2396 = vmatpush1.bf16.msra.mxu0 %v1468
    %2397 = vmatprep.subr.bf16.mxu0 %v1477
    %2398 = vmatpush1.bf16.msra.mxu0 %v1476
    %2399 = vmatprep.subr.bf16.mxu0 %v1485
    %2400 = vmatpush1.bf16.msra.mxu0 %v1484
    %2401 = vmatprep.subr.bf16.mxu0 %v1493
    %2402 = vmatpush1.bf16.msra.mxu0 %v1492
    %2403 = vmatprep.subr.bf16.mxu0 %v1501
    %2404 = vmatpush1.bf16.msra.mxu0 %v1500
    %2405 = vmatprep.subr.bf16.mxu0 %v1509
    %2406 = vmatpush1.bf16.msra.mxu0 %v1508
    %2407 = vmatprep.subr.bf16.mxu0 %v1517
    %2408 = vmatpush1.bf16.msra.mxu0 %v1516
    %2409 = vmatprep.subr.bf16.mxu0 %v1525
    %2410 = vmatpush1.bf16.msra.mxu0 %v1524
    %2411 = vmatprep.subr.bf16.mxu0 %v1533
    %2412 = vmatpush1.bf16.msra.mxu0 %v1532
    %2413 = vmatprep.subr.bf16.mxu0 %v1541
    %2414 = vmatpush1.bf16.msra.mxu0 %v1540
    %2415 = vmatprep.subr.bf16.mxu0 %v1549
    %2416 = vmatpush1.bf16.msra.mxu0 %v1548
    %2417 = vmatprep.subr.bf16.mxu0 %v1557
    %2418 = vmatpush1.bf16.msra.mxu0 %v1556
    %2419 = vmatprep.subr.bf16.mxu0 %v1565
    %2420 = vmatpush1.bf16.msra.mxu0 %v1564
    %2421 = vmatprep.mubr.bf16.mxu0 %v483
    %2422 = vmatmul.mubr.bf16.gmra.mrb[0].mxu0 %v482
    %v2423 = vpop.f32.mrb[0].mxu0
    %v2424 = vadd.f32 %v2311, %v2423
    %v2425 = vpop.f32.mrb[0].mxu0
    %v2426 = vadd.f32 %v2313, %v2425
    %v2427 = vpop.f32.mrb[0].mxu0
    %v2428 = vadd.f32 %v2315, %v2427
    %v2429 = vpop.f32.mrb[0].mxu0
    %v2430 = vadd.f32 %v2317, %v2429
    %2431 = vmatprep.mubr.bf16.mxu0 %v487
    %2432 = vmatmul.mubr.bf16.gmra.mrb[0].mxu0 %v486
    %v2433 = vpop.f32.mrb[0].mxu0
    %v2434 = vadd.f32 %v2321, %v2433
    %v2435 = vpop.f32.mrb[0].mxu0
    %v2436 = vadd.f32 %v2323, %v2435
    %v2437 = vpop.f32.mrb[0].mxu0
    %v2438 = vadd.f32 %v2325, %v2437
    %v2439 = vpop.f32.mrb[0].mxu0
    %v2440 = vadd.f32 %v2327, %v2439
    %2441 = vmatprep.mubr.bf16.mxu0 %v491
    %2442 = vmatmul.mubr.bf16.gmra.mrb[0].mxu0 %v490
    %v2443 = vpop.f32.mrb[0].mxu0
    %v2444 = vadd.f32 %v2331, %v2443
    %v2445 = vpop.f32.mrb[0].mxu0
    %v2446 = vadd.f32 %v2333, %v2445
    %v2447 = vpop.f32.mrb[0].mxu0
    %v2448 = vadd.f32 %v2335, %v2447
    %v2449 = vpop.f32.mrb[0].mxu0
    %v2450 = vadd.f32 %v2337, %v2449
    %2451 = vmatprep.mubr.bf16.mxu0 %v495
    %2452 = vmatmul.mubr.bf16.gmra.mrb[0].mxu0 %v494
    %v2453 = vpop.f32.mrb[0].mxu0
    %v2454 = vadd.f32 %v2341, %v2453
    %v2455 = vpop.f32.mrb[0].mxu0
    %v2456 = vadd.f32 %v2343, %v2455
    %v2457 = vpop.f32.mrb[0].mxu0
    %v2458 = vadd.f32 %v2345, %v2457
    %v2459 = vpop.f32.mrb[0].mxu0
    %v2460 = vadd.f32 %v2347, %v2459
    %2461 = vmatprep.mubr.bf16.mxu0 %v499
    %2462 = vmatmul.mubr.bf16.gmra.mrb[0].mxu0 %v498
    %v2463 = vpop.f32.mrb[0].mxu0
    %v2464 = vadd.f32 %v2351, %v2463
    %v2465 = vpop.f32.mrb[0].mxu0
    %v2466 = vadd.f32 %v2353, %v2465
    %v2467 = vpop.f32.mrb[0].mxu0
    %v2468 = vadd.f32 %v2355, %v2467
    %v2469 = vpop.f32.mrb[0].mxu0
    %v2470 = vadd.f32 %v2357, %v2469
    %2471 = vmatprep.mubr.bf16.mxu0 %v503
    %2472 = vmatmul.mubr.bf16.gmra.mrb[0].mxu0 %v502
    %v2473 = vpop.f32.mrb[0].mxu0
    %v2474 = vadd.f32 %v2361, %v2473
    %v2475 = vpop.f32.mrb[0].mxu0
    %v2476 = vadd.f32 %v2363, %v2475
    %v2477 = vpop.f32.mrb[0].mxu0
    %v2478 = vadd.f32 %v2365, %v2477
    %v2479 = vpop.f32.mrb[0].mxu0
    %v2480 = vadd.f32 %v2367, %v2479
    %2481 = vmatprep.mubr.bf16.mxu0 %v507
    %2482 = vmatmul.mubr.bf16.gmra.mrb[0].mxu0 %v506
    %v2483 = vpop.f32.mrb[0].mxu0
    %v2484 = vadd.f32 %v2371, %v2483
    %v2485 = vpop.f32.mrb[0].mxu0
    %v2486 = vadd.f32 %v2373, %v2485
    %v2487 = vpop.f32.mrb[0].mxu0
    %v2488 = vadd.f32 %v2375, %v2487
    %v2489 = vpop.f32.mrb[0].mxu0
    %v2490 = vadd.f32 %v2377, %v2489
    %2491 = vmatprep.mubr.bf16.mxu0 %v511
    %2492 = vmatmul.mubr.bf16.gmra.mrb[0].mxu0 %v510
    %v2493 = vpop.f32.mrb[0].mxu0
    %v2494 = vadd.f32 %v2381, %v2493
    %v2495 = vpop.f32.mrb[0].mxu0
    %v2496 = vadd.f32 %v2383, %v2495
    %v2497 = vpop.f32.mrb[0].mxu0
    %v2498 = vadd.f32 %v2385, %v2497
    %v2499 = vpop.f32.mrb[0].mxu0
    %v2500 = vadd.f32 %v2387, %v2499
    %2501 = vdwg.mxu0
    %2502 = vmatprep.subr.bf16.mxu0 %v1319
    %2503 = vmatpush1.bf16.msra.mxu0 %v1318
    %2504 = vmatprep.subr.bf16.mxu0 %v1327
    %2505 = vmatpush1.bf16.msra.mxu0 %v1326
    %2506 = vmatprep.subr.bf16.mxu0 %v1335
    %2507 = vmatpush1.bf16.msra.mxu0 %v1334
    %2508 = vmatprep.subr.bf16.mxu0 %v1343
    %2509 = vmatpush1.bf16.msra.mxu0 %v1342
    %2510 = vmatprep.subr.bf16.mxu0 %v1351
    %2511 = vmatpush1.bf16.msra.mxu0 %v1350
    %2512 = vmatprep.subr.bf16.mxu0 %v1359
    %2513 = vmatpush1.bf16.msra.mxu0 %v1358
    %2514 = vmatprep.subr.bf16.mxu0 %v1367
    %2515 = vmatpush1.bf16.msra.mxu0 %v1366
    %2516 = vmatprep.subr.bf16.mxu0 %v1375
    %2517 = vmatpush1.bf16.msra.mxu0 %v1374
    %2518 = vmatprep.subr.bf16.mxu0 %v1383
    %2519 = vmatpush1.bf16.msra.mxu0 %v1382
    %2520 = vmatprep.subr.bf16.mxu0 %v1391
    %2521 = vmatpush1.bf16.msra.mxu0 %v1390
    %2522 = vmatprep.subr.bf16.mxu0 %v1399
    %2523 = vmatpush1.bf16.msra.mxu0 %v1398
    %2524 = vmatprep.subr.bf16.mxu0 %v1407
    %2525 = vmatpush1.bf16.msra.mxu0 %v1406
    %2526 = vmatprep.subr.bf16.mxu0 %v1415
    %2527 = vmatpush1.bf16.msra.mxu0 %v1414
    %2528 = vmatprep.subr.bf16.mxu0 %v1423
    %2529 = vmatpush1.bf16.msra.mxu0 %v1422
    %2530 = vmatprep.subr.bf16.mxu0 %v1431
    %2531 = vmatpush1.bf16.msra.mxu0 %v1430
    %2532 = vmatprep.subr.bf16.mxu0 %v1439
    %2533 = vmatpush1.bf16.msra.mxu0 %v1438
    %2534 = vmatprep.mubr.bf16.mxu0 %v481
    %2535 = vmatmul.mubr.bf16.gmra.mrb[0].mxu0 %v480
    %v2536 = vpop.f32.mrb[0].mxu0
    %v2537 = vadd.f32 %v371, %v2536
    %v2538 = vpop.f32.mrb[0].mxu0
    %v2539 = vadd.f32 %v375, %v2538
    %v2540 = vpop.f32.mrb[0].mxu0
    %v2541 = vadd.f32 %v371, %v2540
    %v2542 = vpop.f32.mrb[0].mxu0
    %v2543 = vadd.f32 %v375, %v2542
    %2544 = vmatprep.mubr.bf16.mxu0 %v485
    %2545 = vmatmul.mubr.bf16.gmra.mrb[0].mxu0 %v484
    %v2546 = vpop.f32.mrb[0].mxu0
    %v2547 = vadd.f32 %v371, %v2546
    %v2548 = vpop.f32.mrb[0].mxu0
    %v2549 = vadd.f32 %v375, %v2548
    %v2550 = vpop.f32.mrb[0].mxu0
    %v2551 = vadd.f32 %v371, %v2550
    %v2552 = vpop.f32.mrb[0].mxu0
    %v2553 = vadd.f32 %v375, %v2552
    %2554 = vmatprep.mubr.bf16.mxu0 %v489
    %2555 = vmatmul.mubr.bf16.gmra.mrb[0].mxu0 %v488
    %v2556 = vpop.f32.mrb[0].mxu0
    %v2557 = vadd.f32 %v371, %v2556
    %v2558 = vpop.f32.mrb[0].mxu0
    %v2559 = vadd.f32 %v375, %v2558
    %v2560 = vpop.f32.mrb[0].mxu0
    %v2561 = vadd.f32 %v371, %v2560
    %v2562 = vpop.f32.mrb[0].mxu0
    %v2563 = vadd.f32 %v375, %v2562
    %2564 = vmatprep.mubr.bf16.mxu0 %v493
    %2565 = vmatmul.mubr.bf16.gmra.mrb[0].mxu0 %v492
    %v2566 = vpop.f32.mrb[0].mxu0
    %v2567 = vadd.f32 %v371, %v2566
    %v2568 = vpop.f32.mrb[0].mxu0
    %v2569 = vadd.f32 %v375, %v2568
    %v2570 = vpop.f32.mrb[0].mxu0
    %v2571 = vadd.f32 %v371, %v2570
    %v2572 = vpop.f32.mrb[0].mxu0
    %v2573 = vadd.f32 %v375, %v2572
    %2574 = vmatprep.mubr.bf16.mxu0 %v497
    %2575 = vmatmul.mubr.bf16.gmra.mrb[0].mxu0 %v496
    %v2576 = vpop.f32.mrb[0].mxu0
    %v2577 = vadd.f32 %v371, %v2576
    %v2578 = vpop.f32.mrb[0].mxu0
    %v2579 = vadd.f32 %v375, %v2578
    %v2580 = vpop.f32.mrb[0].mxu0
    %v2581 = vadd.f32 %v371, %v2580
    %v2582 = vpop.f32.mrb[0].mxu0
    %v2583 = vadd.f32 %v375, %v2582
    %2584 = vmatprep.mubr.bf16.mxu0 %v501
    %2585 = vmatmul.mubr.bf16.gmra.mrb[0].mxu0 %v500
    %v2586 = vpop.f32.mrb[0].mxu0
    %v2587 = vadd.f32 %v371, %v2586
    %v2588 = vpop.f32.mrb[0].mxu0
    %v2589 = vadd.f32 %v375, %v2588
    %v2590 = vpop.f32.mrb[0].mxu0
    %v2591 = vadd.f32 %v371, %v2590
    %v2592 = vpop.f32.mrb[0].mxu0
    %v2593 = vadd.f32 %v375, %v2592
    %2594 = vmatprep.mubr.bf16.mxu0 %v505
    %2595 = vmatmul.mubr.bf16.gmra.mrb[0].mxu0 %v504
    %v2596 = vpop.f32.mrb[0].mxu0
    %v2597 = vadd.f32 %v371, %v2596
    %v2598 = vpop.f32.mrb[0].mxu0
    %v2599 = vadd.f32 %v375, %v2598
    %v2600 = vpop.f32.mrb[0].mxu0
    %v2601 = vadd.f32 %v371, %v2600
    %v2602 = vpop.f32.mrb[0].mxu0
    %v2603 = vadd.f32 %v375, %v2602
    %2604 = vmatprep.mubr.bf16.mxu0 %v509
    %2605 = vmatmul.mubr.bf16.gmra.mrb[0].mxu0 %v508
    %v2606 = vpop.f32.mrb[0].mxu0
    %v2607 = vadd.f32 %v371, %v2606
    %v2608 = vpop.f32.mrb[0].mxu0
    %v2609 = vadd.f32 %v375, %v2608
    %v2610 = vpop.f32.mrb[0].mxu0
    %v2611 = vadd.f32 %v371, %v2610
    %v2612 = vpop.f32.mrb[0].mxu0
    %v2613 = vadd.f32 %v375, %v2612
    %2614 = vdwg.mxu0
    %2615 = vmatprep.subr.bf16.mxu0 %v1447
    %2616 = vmatpush1.bf16.msra.mxu0 %v1446
    %2617 = vmatprep.subr.bf16.mxu0 %v1455
    %2618 = vmatpush1.bf16.msra.mxu0 %v1454
    %2619 = vmatprep.subr.bf16.mxu0 %v1463
    %2620 = vmatpush1.bf16.msra.mxu0 %v1462
    %2621 = vmatprep.subr.bf16.mxu0 %v1471
    %2622 = vmatpush1.bf16.msra.mxu0 %v1470
    %2623 = vmatprep.subr.bf16.mxu0 %v1479
    %2624 = vmatpush1.bf16.msra.mxu0 %v1478
    %2625 = vmatprep.subr.bf16.mxu0 %v1487
    %2626 = vmatpush1.bf16.msra.mxu0 %v1486
    %2627 = vmatprep.subr.bf16.mxu0 %v1495
    %2628 = vmatpush1.bf16.msra.mxu0 %v1494
    %2629 = vmatprep.subr.bf16.mxu0 %v1503
    %2630 = vmatpush1.bf16.msra.mxu0 %v1502
    %2631 = vmatprep.subr.bf16.mxu0 %v1511
    %2632 = vmatpush1.bf16.msra.mxu0 %v1510
    %2633 = vmatprep.subr.bf16.mxu0 %v1519
    %2634 = vmatpush1.bf16.msra.mxu0 %v1518
    %2635 = vmatprep.subr.bf16.mxu0 %v1527
    %2636 = vmatpush1.bf16.msra.mxu0 %v1526
    %2637 = vmatprep.subr.bf16.mxu0 %v1535
    %2638 = vmatpush1.bf16.msra.mxu0 %v1534
    %2639 = vmatprep.subr.bf16.mxu0 %v1543
    %2640 = vmatpush1.bf16.msra.mxu0 %v1542
    %2641 = vmatprep.subr.bf16.mxu0 %v1551
    %2642 = vmatpush1.bf16.msra.mxu0 %v1550
    %2643 = vmatprep.subr.bf16.mxu0 %v1559
    %2644 = vmatpush1.bf16.msra.mxu0 %v1558
    %2645 = vmatprep.subr.bf16.mxu0 %v1567
    %2646 = vmatpush1.bf16.msra.mxu0 %v1566
    %2647 = vmatprep.mubr.bf16.mxu0 %v483
    %2648 = vmatmul.mubr.bf16.gmra.mrb[0].mxu0 %v482
    %v2649 = vpop.f32.mrb[0].mxu0
    %v2650 = vadd.f32 %v2537, %v2649
    %v2651 = vpop.f32.mrb[0].mxu0
    %v2652 = vadd.f32 %v2539, %v2651
    %v2653 = vpop.f32.mrb[0].mxu0
    %v2654 = vadd.f32 %v2541, %v2653
    %v2655 = vpop.f32.mrb[0].mxu0
    %v2656 = vadd.f32 %v2543, %v2655
    %2657 = vmatprep.mubr.bf16.mxu0 %v487
    %2658 = vmatmul.mubr.bf16.gmra.mrb[0].mxu0 %v486
    %v2659 = vpop.f32.mrb[0].mxu0
    %v2660 = vadd.f32 %v2547, %v2659
    %v2661 = vpop.f32.mrb[0].mxu0
    %v2662 = vadd.f32 %v2549, %v2661
    %v2663 = vpop.f32.mrb[0].mxu0
    %v2664 = vadd.f32 %v2551, %v2663
    %v2665 = vpop.f32.mrb[0].mxu0
    %v2666 = vadd.f32 %v2553, %v2665
    %2667 = vmatprep.mubr.bf16.mxu0 %v491
    %2668 = vmatmul.mubr.bf16.gmra.mrb[0].mxu0 %v490
    %v2669 = vpop.f32.mrb[0].mxu0
    %v2670 = vadd.f32 %v2557, %v2669
    %v2671 = vpop.f32.mrb[0].mxu0
    %v2672 = vadd.f32 %v2559, %v2671
    %v2673 = vpop.f32.mrb[0].mxu0
    %v2674 = vadd.f32 %v2561, %v2673
    %v2675 = vpop.f32.mrb[0].mxu0
    %v2676 = vadd.f32 %v2563, %v2675
    %2677 = vmatprep.mubr.bf16.mxu0 %v495
    %2678 = vmatmul.mubr.bf16.gmra.mrb[0].mxu0 %v494
    %v2679 = vpop.f32.mrb[0].mxu0
    %v2680 = vadd.f32 %v2567, %v2679
    %v2681 = vpop.f32.mrb[0].mxu0
    %v2682 = vadd.f32 %v2569, %v2681
    %v2683 = vpop.f32.mrb[0].mxu0
    %v2684 = vadd.f32 %v2571, %v2683
    %v2685 = vpop.f32.mrb[0].mxu0
    %v2686 = vadd.f32 %v2573, %v2685
    %2687 = vmatprep.mubr.bf16.mxu0 %v499
    %2688 = vmatmul.mubr.bf16.gmra.mrb[0].mxu0 %v498
    %v2689 = vpop.f32.mrb[0].mxu0
    %v2690 = vadd.f32 %v2577, %v2689
    %v2691 = vpop.f32.mrb[0].mxu0
    %v2692 = vadd.f32 %v2579, %v2691
    %v2693 = vpop.f32.mrb[0].mxu0
    %v2694 = vadd.f32 %v2581, %v2693
    %v2695 = vpop.f32.mrb[0].mxu0
    %v2696 = vadd.f32 %v2583, %v2695
    %2697 = vmatprep.mubr.bf16.mxu0 %v503
    %2698 = vmatmul.mubr.bf16.gmra.mrb[0].mxu0 %v502
    %v2699 = vpop.f32.mrb[0].mxu0
    %v2700 = vadd.f32 %v2587, %v2699
    %v2701 = vpop.f32.mrb[0].mxu0
    %v2702 = vadd.f32 %v2589, %v2701
    %v2703 = vpop.f32.mrb[0].mxu0
    %v2704 = vadd.f32 %v2591, %v2703
    %v2705 = vpop.f32.mrb[0].mxu0
    %v2706 = vadd.f32 %v2593, %v2705
    %2707 = vmatprep.mubr.bf16.mxu0 %v507
    %2708 = vmatmul.mubr.bf16.gmra.mrb[0].mxu0 %v506
    %v2709 = vpop.f32.mrb[0].mxu0
    %v2710 = vadd.f32 %v2597, %v2709
    %v2711 = vpop.f32.mrb[0].mxu0
    %v2712 = vadd.f32 %v2599, %v2711
    %v2713 = vpop.f32.mrb[0].mxu0
    %v2714 = vadd.f32 %v2601, %v2713
    %v2715 = vpop.f32.mrb[0].mxu0
    %v2716 = vadd.f32 %v2603, %v2715
    %2717 = vmatprep.mubr.bf16.mxu0 %v511
    %2718 = vmatmul.mubr.bf16.gmra.mrb[0].mxu0 %v510
    %v2719 = vpop.f32.mrb[0].mxu0
    %v2720 = vadd.f32 %v2607, %v2719
    %v2721 = vpop.f32.mrb[0].mxu0
    %v2722 = vadd.f32 %v2609, %v2721
    %v2723 = vpop.f32.mrb[0].mxu0
    %v2724 = vadd.f32 %v2611, %v2723
    %v2725 = vpop.f32.mrb[0].mxu0
    %v2726 = vadd.f32 %v2613, %v2725
    %2727 = vdwg.mxu0
    %v2728 = vpack.c.bf16 %v1976, %v1972
    %v2729 = vpack.c.bf16 %v1978, %v1974
    %v2730 = vpack.c.bf16 %v2202, %v2198
    %v2731 = vpack.c.bf16 %v2204, %v2200
    %v2732 = vpack.c.bf16 %v2428, %v2424
    %v2733 = vpack.c.bf16 %v2430, %v2426
    %v2734 = vpack.c.bf16 %v2654, %v2650
    %v2735 = vpack.c.bf16 %v2656, %v2652
    %v2736 = vpack.c.bf16 %v1986, %v1982
    %v2737 = vpack.c.bf16 %v1988, %v1984
    %v2738 = vpack.c.bf16 %v2212, %v2208
    %v2739 = vpack.c.bf16 %v2214, %v2210
    %v2740 = vpack.c.bf16 %v2438, %v2434
    %v2741 = vpack.c.bf16 %v2440, %v2436
    %v2742 = vpack.c.bf16 %v2664, %v2660
    %v2743 = vpack.c.bf16 %v2666, %v2662
    %v2744 = vpack.c.bf16 %v1996, %v1992
    %v2745 = vpack.c.bf16 %v1998, %v1994
    %v2746 = vpack.c.bf16 %v2222, %v2218
    %v2747 = vpack.c.bf16 %v2224, %v2220
    %v2748 = vpack.c.bf16 %v2448, %v2444
    %v2749 = vpack.c.bf16 %v2450, %v2446
    %v2750 = vpack.c.bf16 %v2674, %v2670
    %v2751 = vpack.c.bf16 %v2676, %v2672
    %v2752 = vpack.c.bf16 %v2006, %v2002
    %v2753 = vpack.c.bf16 %v2008, %v2004
    %v2754 = vpack.c.bf16 %v2232, %v2228
    %v2755 = vpack.c.bf16 %v2234, %v2230
    %v2756 = vpack.c.bf16 %v2458, %v2454
    %v2757 = vpack.c.bf16 %v2460, %v2456
    %v2758 = vpack.c.bf16 %v2684, %v2680
    %v2759 = vpack.c.bf16 %v2686, %v2682
    %v2760 = vpack.c.bf16 %v2016, %v2012
    %v2761 = vpack.c.bf16 %v2018, %v2014
    %v2762 = vpack.c.bf16 %v2242, %v2238
    %v2763 = vpack.c.bf16 %v2244, %v2240
    %v2764 = vpack.c.bf16 %v2468, %v2464
    %v2765 = vpack.c.bf16 %v2470, %v2466
    %v2766 = vpack.c.bf16 %v2694, %v2690
    %v2767 = vpack.c.bf16 %v2696, %v2692
    %v2768 = vpack.c.bf16 %v2026, %v2022
    %v2769 = vpack.c.bf16 %v2028, %v2024
    %v2770 = vpack.c.bf16 %v2252, %v2248
    %v2771 = vpack.c.bf16 %v2254, %v2250
    %v2772 = vpack.c.bf16 %v2478, %v2474
    %v2773 = vpack.c.bf16 %v2480, %v2476
    %v2774 = vpack.c.bf16 %v2704, %v2700
    %v2775 = vpack.c.bf16 %v2706, %v2702
    %v2776 = vpack.c.bf16 %v2036, %v2032
    %v2777 = vpack.c.bf16 %v2038, %v2034
    %v2778 = vpack.c.bf16 %v2262, %v2258
    %v2779 = vpack.c.bf16 %v2264, %v2260
    %v2780 = vpack.c.bf16 %v2488, %v2484
    %v2781 = vpack.c.bf16 %v2490, %v2486
    %v2782 = vpack.c.bf16 %v2714, %v2710
    %v2783 = vpack.c.bf16 %v2716, %v2712
    %v2784 = vpack.c.bf16 %v2046, %v2042
    %v2785 = vpack.c.bf16 %v2048, %v2044
    %v2786 = vpack.c.bf16 %v2272, %v2268
    %v2787 = vpack.c.bf16 %v2274, %v2270
    %v2788 = vpack.c.bf16 %v2498, %v2494
    %v2789 = vpack.c.bf16 %v2500, %v2496
    %v2790 = vpack.c.bf16 %v2724, %v2720
    %v2791 = vpack.c.bf16 %v2726, %v2722
    %v2856 = vunpack.c.l.b16 %v2728
    %v2857 = vunpack.c.l.b16 %v2729
    %v2858 = vunpack.c.l.b16 %v2730
    %v2859 = vunpack.c.l.b16 %v2731
    %v2860 = vunpack.c.l.b16 %v2732
    %v2861 = vunpack.c.l.b16 %v2733
    %v2862 = vunpack.c.l.b16 %v2734
    %v2863 = vunpack.c.l.b16 %v2735
    %v2864 = vunpack.c.h.b16 %v2728
    %v2865 = vunpack.c.h.b16 %v2729
    %v2866 = vunpack.c.h.b16 %v2730
    %v2867 = vunpack.c.h.b16 %v2731
    %v2868 = vunpack.c.h.b16 %v2732
    %v2869 = vunpack.c.h.b16 %v2733
    %v2870 = vunpack.c.h.b16 %v2734
    %v2871 = vunpack.c.h.b16 %v2735
    %v2872 = vunpack.c.l.b16 %v2736
    %v2873 = vunpack.c.l.b16 %v2737
    %v2874 = vunpack.c.l.b16 %v2738
    %v2875 = vunpack.c.l.b16 %v2739
    %v2876 = vunpack.c.l.b16 %v2740
    %v2877 = vunpack.c.l.b16 %v2741
    %v2878 = vunpack.c.l.b16 %v2742
    %v2879 = vunpack.c.l.b16 %v2743
    %v2880 = vunpack.c.h.b16 %v2736
    %v2881 = vunpack.c.h.b16 %v2737
    %v2882 = vunpack.c.h.b16 %v2738
    %v2883 = vunpack.c.h.b16 %v2739
    %v2884 = vunpack.c.h.b16 %v2740
    %v2885 = vunpack.c.h.b16 %v2741
    %v2886 = vunpack.c.h.b16 %v2742
    %v2887 = vunpack.c.h.b16 %v2743
    %v2888 = vunpack.c.l.b16 %v2744
    %v2889 = vunpack.c.l.b16 %v2745
    %v2890 = vunpack.c.l.b16 %v2746
    %v2891 = vunpack.c.l.b16 %v2747
    %v2892 = vunpack.c.l.b16 %v2748
    %v2893 = vunpack.c.l.b16 %v2749
    %v2894 = vunpack.c.l.b16 %v2750
    %v2895 = vunpack.c.l.b16 %v2751
    %v2896 = vunpack.c.h.b16 %v2744
    %v2897 = vunpack.c.h.b16 %v2745
    %v2898 = vunpack.c.h.b16 %v2746
    %v2899 = vunpack.c.h.b16 %v2747
    %v2900 = vunpack.c.h.b16 %v2748
    %v2901 = vunpack.c.h.b16 %v2749
    %v2902 = vunpack.c.h.b16 %v2750
    %v2903 = vunpack.c.h.b16 %v2751
    %v2904 = vunpack.c.l.b16 %v2752
    %v2905 = vunpack.c.l.b16 %v2753
    %v2906 = vunpack.c.l.b16 %v2754
    %v2907 = vunpack.c.l.b16 %v2755
    %v2908 = vunpack.c.l.b16 %v2756
    %v2909 = vunpack.c.l.b16 %v2757
    %v2910 = vunpack.c.l.b16 %v2758
    %v2911 = vunpack.c.l.b16 %v2759
    %v2912 = vunpack.c.h.b16 %v2752
    %v2913 = vunpack.c.h.b16 %v2753
    %v2914 = vunpack.c.h.b16 %v2754
    %v2915 = vunpack.c.h.b16 %v2755
    %v2916 = vunpack.c.h.b16 %v2756
    %v2917 = vunpack.c.h.b16 %v2757
    %v2918 = vunpack.c.h.b16 %v2758
    %v2919 = vunpack.c.h.b16 %v2759
    %v2920 = vunpack.c.l.b16 %v2760
    %v2921 = vunpack.c.l.b16 %v2761
    %v2922 = vunpack.c.l.b16 %v2762
    %v2923 = vunpack.c.l.b16 %v2763
    %v2924 = vunpack.c.l.b16 %v2764
    %v2925 = vunpack.c.l.b16 %v2765
    %v2926 = vunpack.c.l.b16 %v2766
    %v2927 = vunpack.c.l.b16 %v2767
    %v2928 = vunpack.c.h.b16 %v2760
    %v2929 = vunpack.c.h.b16 %v2761
    %v2930 = vunpack.c.h.b16 %v2762
    %v2931 = vunpack.c.h.b16 %v2763
    %v2932 = vunpack.c.h.b16 %v2764
    %v2933 = vunpack.c.h.b16 %v2765
    %v2934 = vunpack.c.h.b16 %v2766
    %v2935 = vunpack.c.h.b16 %v2767
    %v2936 = vunpack.c.l.b16 %v2768
    %v2937 = vunpack.c.l.b16 %v2769
    %v2938 = vunpack.c.l.b16 %v2770
    %v2939 = vunpack.c.l.b16 %v2771
    %v2940 = vunpack.c.l.b16 %v2772
    %v2941 = vunpack.c.l.b16 %v2773
    %v2942 = vunpack.c.l.b16 %v2774
    %v2943 = vunpack.c.l.b16 %v2775
    %v2944 = vunpack.c.h.b16 %v2768
    %v2945 = vunpack.c.h.b16 %v2769
    %v2946 = vunpack.c.h.b16 %v2770
    %v2947 = vunpack.c.h.b16 %v2771
    %v2948 = vunpack.c.h.b16 %v2772
    %v2949 = vunpack.c.h.b16 %v2773
    %v2950 = vunpack.c.h.b16 %v2774
    %v2951 = vunpack.c.h.b16 %v2775
    %v2952 = vunpack.c.l.b16 %v2776
    %v2953 = vunpack.c.l.b16 %v2777
    %v2954 = vunpack.c.l.b16 %v2778
    %v2955 = vunpack.c.l.b16 %v2779
    %v2956 = vunpack.c.l.b16 %v2780
    %v2957 = vunpack.c.l.b16 %v2781
    %v2958 = vunpack.c.l.b16 %v2782
    %v2959 = vunpack.c.l.b16 %v2783
    %v2960 = vunpack.c.h.b16 %v2776
    %v2961 = vunpack.c.h.b16 %v2777
    %v2962 = vunpack.c.h.b16 %v2778
    %v2963 = vunpack.c.h.b16 %v2779
    %v2964 = vunpack.c.h.b16 %v2780
    %v2965 = vunpack.c.h.b16 %v2781
    %v2966 = vunpack.c.h.b16 %v2782
    %v2967 = vunpack.c.h.b16 %v2783
    %v2968 = vunpack.c.l.b16 %v2784
    %v2969 = vunpack.c.l.b16 %v2785
    %v2970 = vunpack.c.l.b16 %v2786
    %v2971 = vunpack.c.l.b16 %v2787
    %v2972 = vunpack.c.l.b16 %v2788
    %v2973 = vunpack.c.l.b16 %v2789
    %v2974 = vunpack.c.l.b16 %v2790
    %v2975 = vunpack.c.l.b16 %v2791
    %v2976 = vunpack.c.h.b16 %v2784
    %v2977 = vunpack.c.h.b16 %v2785
    %v2978 = vunpack.c.h.b16 %v2786
    %v2979 = vunpack.c.h.b16 %v2787
    %v2980 = vunpack.c.h.b16 %v2788
    %v2981 = vunpack.c.h.b16 %v2789
    %v2982 = vunpack.c.h.b16 %v2790
    %v2983 = vunpack.c.h.b16 %v2791
    %v2984 = vpack.c.b16 %v2857, %v2856
    %v2985 = vpack.c.b16 %v2859, %v2858
    %v2986 = vpack.c.b16 %v2861, %v2860
    %v2987 = vpack.c.b16 %v2863, %v2862
    %v2988 = vpack.c.b16 %v2865, %v2864
    %v2989 = vpack.c.b16 %v2867, %v2866
    %v2990 = vpack.c.b16 %v2869, %v2868
    %v2991 = vpack.c.b16 %v2871, %v2870
    %v2992 = vpack.c.b16 %v2873, %v2872
    %v2993 = vpack.c.b16 %v2875, %v2874
    %v2994 = vpack.c.b16 %v2877, %v2876
    %v2995 = vpack.c.b16 %v2879, %v2878
    %v2996 = vpack.c.b16 %v2881, %v2880
    %v2997 = vpack.c.b16 %v2883, %v2882
    %v2998 = vpack.c.b16 %v2885, %v2884
    %v2999 = vpack.c.b16 %v2887, %v2886
    %v3000 = vpack.c.b16 %v2889, %v2888
    %v3001 = vpack.c.b16 %v2891, %v2890
    %v3002 = vpack.c.b16 %v2893, %v2892
    %v3003 = vpack.c.b16 %v2895, %v2894
    %v3004 = vpack.c.b16 %v2897, %v2896
    %v3005 = vpack.c.b16 %v2899, %v2898
    %v3006 = vpack.c.b16 %v2901, %v2900
    %v3007 = vpack.c.b16 %v2903, %v2902
    %v3008 = vpack.c.b16 %v2905, %v2904
    %v3009 = vpack.c.b16 %v2907, %v2906
    %v3010 = vpack.c.b16 %v2909, %v2908
    %v3011 = vpack.c.b16 %v2911, %v2910
    %v3012 = vpack.c.b16 %v2913, %v2912
    %v3013 = vpack.c.b16 %v2915, %v2914
    %v3014 = vpack.c.b16 %v2917, %v2916
    %v3015 = vpack.c.b16 %v2919, %v2918
    %v3016 = vpack.c.b16 %v2921, %v2920
    %v3017 = vpack.c.b16 %v2923, %v2922
    %v3018 = vpack.c.b16 %v2925, %v2924
    %v3019 = vpack.c.b16 %v2927, %v2926
    %v3020 = vpack.c.b16 %v2929, %v2928
    %v3021 = vpack.c.b16 %v2931, %v2930
    %v3022 = vpack.c.b16 %v2933, %v2932
    %v3023 = vpack.c.b16 %v2935, %v2934
    %v3024 = vpack.c.b16 %v2937, %v2936
    %v3025 = vpack.c.b16 %v2939, %v2938
    %v3026 = vpack.c.b16 %v2941, %v2940
    %v3027 = vpack.c.b16 %v2943, %v2942
    %v3028 = vpack.c.b16 %v2945, %v2944
    %v3029 = vpack.c.b16 %v2947, %v2946
    %v3030 = vpack.c.b16 %v2949, %v2948
    %v3031 = vpack.c.b16 %v2951, %v2950
    %v3032 = vpack.c.b16 %v2953, %v2952
    %v3033 = vpack.c.b16 %v2955, %v2954
    %v3034 = vpack.c.b16 %v2957, %v2956
    %v3035 = vpack.c.b16 %v2959, %v2958
    %v3036 = vpack.c.b16 %v2961, %v2960
    %v3037 = vpack.c.b16 %v2963, %v2962
    %v3038 = vpack.c.b16 %v2965, %v2964
    %v3039 = vpack.c.b16 %v2967, %v2966
    %v3040 = vpack.c.b16 %v2969, %v2968
    %v3041 = vpack.c.b16 %v2971, %v2970
    %v3042 = vpack.c.b16 %v2973, %v2972
    %v3043 = vpack.c.b16 %v2975, %v2974
    %v3044 = vpack.c.b16 %v2977, %v2976
    %v3045 = vpack.c.b16 %v2979, %v2978
    %v3046 = vpack.c.b16 %v2981, %v2980
    %v3047 = vpack.c.b16 %v2983, %v2982
    %3112 = vst [vmem:[#allocation8] sm:$0xff] %v2984
    %3113 = vst [vmem:[#allocation8 + $0x8] sm:$0xff] %v2985
    %3114 = vst [vmem:[#allocation8 + $0x10] sm:$0xff] %v2986
    %3115 = vst [vmem:[#allocation8 + $0x18] sm:$0xff] %v2987
    %3116 = vst [vmem:[#allocation8 + $0x20] sm:$0xff] %v2988
    %3117 = vst [vmem:[#allocation8 + $0x28] sm:$0xff] %v2989
    %3118 = vst [vmem:[#allocation8 + $0x30] sm:$0xff] %v2990
    %3119 = vst [vmem:[#allocation8 + $0x38] sm:$0xff] %v2991
    %3120 = vst [vmem:[#allocation8 + $0x40] sm:$0xff] %v2992
    %3121 = vst [vmem:[#allocation8 + $0x48] sm:$0xff] %v2993
    %3122 = vst [vmem:[#allocation8 + $0x50] sm:$0xff] %v2994
    %3123 = vst [vmem:[#allocation8 + $0x58] sm:$0xff] %v2995
    %3124 = vst [vmem:[#allocation8 + $0x60] sm:$0xff] %v2996
    %3125 = vst [vmem:[#allocation8 + $0x68] sm:$0xff] %v2997
    %3126 = vst [vmem:[#allocation8 + $0x70] sm:$0xff] %v2998
    %3127 = vst [vmem:[#allocation8 + $0x78] sm:$0xff] %v2999
    %3128 = vst [vmem:[#allocation8 + $0x80] sm:$0xff] %v3000
    %3129 = vst [vmem:[#allocation8 + $0x88] sm:$0xff] %v3001
    %3130 = vst [vmem:[#allocation8 + $0x90] sm:$0xff] %v3002
    %3131 = vst [vmem:[#allocation8 + $0x98] sm:$0xff] %v3003
    %3132 = vst [vmem:[#allocation8 + $0xa0] sm:$0xff] %v3004
    %3133 = vst [vmem:[#allocation8 + $0xa8] sm:$0xff] %v3005
    %3134 = vst [vmem:[#allocation8 + $0xb0] sm:$0xff] %v3006
    %3135 = vst [vmem:[#allocation8 + $0xb8] sm:$0xff] %v3007
    %3136 = vst [vmem:[#allocation8 + $0xc0] sm:$0xff] %v3008
    %3137 = vst [vmem:[#allocation8 + $0xc8] sm:$0xff] %v3009
    %3138 = vst [vmem:[#allocation8 + $0xd0] sm:$0xff] %v3010
    %3139 = vst [vmem:[#allocation8 + $0xd8] sm:$0xff] %v3011
    %3140 = vst [vmem:[#allocation8 + $0xe0] sm:$0xff] %v3012
    %3141 = vst [vmem:[#allocation8 + $0xe8] sm:$0xff] %v3013
    %3142 = vst [vmem:[#allocation8 + $0xf0] sm:$0xff] %v3014
    %3143 = vst [vmem:[#allocation8 + $0xf8] sm:$0xff] %v3015
    %3144 = vst [vmem:[#allocation8 + $0x100] sm:$0xff] %v3016
    %3145 = vst [vmem:[#allocation8 + $0x108] sm:$0xff] %v3017
    %3146 = vst [vmem:[#allocation8 + $0x110] sm:$0xff] %v3018
    %3147 = vst [vmem:[#allocation8 + $0x118] sm:$0xff] %v3019
    %3148 = vst [vmem:[#allocation8 + $0x120] sm:$0xff] %v3020
    %3149 = vst [vmem:[#allocation8 + $0x128] sm:$0xff] %v3021
    %3150 = vst [vmem:[#allocation8 + $0x130] sm:$0xff] %v3022
    %3151 = vst [vmem:[#allocation8 + $0x138] sm:$0xff] %v3023
    %3152 = vst [vmem:[#allocation8 + $0x140] sm:$0xff] %v3024
    %3153 = vst [vmem:[#allocation8 + $0x148] sm:$0xff] %v3025
    %3154 = vst [vmem:[#allocation8 + $0x150] sm:$0xff] %v3026
    %3155 = vst [vmem:[#allocation8 + $0x158] sm:$0xff] %v3027
    %3156 = vst [vmem:[#allocation8 + $0x160] sm:$0xff] %v3028
    %3157 = vst [vmem:[#allocation8 + $0x168] sm:$0xff] %v3029
    %3158 = vst [vmem:[#allocation8 + $0x170] sm:$0xff] %v3030
    %3159 = vst [vmem:[#allocation8 + $0x178] sm:$0xff] %v3031
    %3160 = vst [vmem:[#allocation8 + $0x180] sm:$0xff] %v3032
    %3161 = vst [vmem:[#allocation8 + $0x188] sm:$0xff] %v3033
    %3162 = vst [vmem:[#allocation8 + $0x190] sm:$0xff] %v3034
    %3163 = vst [vmem:[#allocation8 + $0x198] sm:$0xff] %v3035
    %3164 = vst [vmem:[#allocation8 + $0x1a0] sm:$0xff] %v3036
    %3165 = vst [vmem:[#allocation8 + $0x1a8] sm:$0xff] %v3037
    %3166 = vst [vmem:[#allocation8 + $0x1b0] sm:$0xff] %v3038
    %3167 = vst [vmem:[#allocation8 + $0x1b8] sm:$0xff] %v3039
    %3168 = vst [vmem:[#allocation8 + $0x1c0] sm:$0xff] %v3040
    %3169 = vst [vmem:[#allocation8 + $0x1c8] sm:$0xff] %v3041
    %3170 = vst [vmem:[#allocation8 + $0x1d0] sm:$0xff] %v3042
    %3171 = vst [vmem:[#allocation8 + $0x1d8] sm:$0xff] %v3043
    %3172 = vst [vmem:[#allocation8 + $0x1e0] sm:$0xff] %v3044
    %3173 = vst [vmem:[#allocation8 + $0x1e8] sm:$0xff] %v3045
    %3174 = vst [vmem:[#allocation8 + $0x1f0] sm:$0xff] %v3046
    %3175 = vst [vmem:[#allocation8 + $0x1f8] sm:$0xff] %v3047
    // Predicated region
    $region26: #{tpu_custom_call.1} parent=1 // pred_check
      _
    $region27: #{tpu_custom_call.1} parent=1 // pred_check_branch
      %3177 = sbr.rel (0) target = $region29
    $region28: #{tpu_custom_call.1} parent=1 // pred_region
      %s3179 = ssub.s32 8192, 8192
      %3180 = vsyncadd [#allocation4], %s3179
      %s3181 = sshll.u32 [#allocation8], 4
      %s3182 = int_to_ptr.vmem [resolvable:$true] %s3181
      %3187 = dma.vmem_to_hbm [thread:$0]  %s3182, 8192, %s3, [#allocation4], 512, 512, 32
    $region29: #{tpu_custom_call.1} parent=1 // pred_fallthru
      _
    // Predicated region
    $region30: #{tpu_custom_call.1} parent=1 // pred_check
      _
    $region31: #{tpu_custom_call.1} parent=1 // pred_check_branch
      %3189 = sbr.rel (0) target = $region33
    $region32: #{tpu_custom_call.1} parent=1 // pred_region
      %3190 = dma.done [#allocation4], 8192
    $region33: #{tpu_custom_call.1} parent=1 // pred_fallthru
      _
    %3191 = vsyncpa [#allocation3], 1
    %3192 = vsyncpa [#allocation6], 1
    %3193 = vsyncpa [#allocation4], 1

</llo_original>
